<compile_context>
chip_gen: v6e
topology: v6e:2x2x1
jax: 0.10.0
libtpu: 0.0.40
codegen_flags: <defaults>
</compile_context>

<pallas_src>
import functools

import jax
import jax.numpy as jnp
from jax.experimental import pallas as pl
from jax.experimental.pallas import tpu as pltpu

LN_EPS = 1e-5
HALO = 16  # >= K//2 (=15), multiple of 8 for sublane alignment


def _ln_glu(xp, gamma, beta, w1a, b1a, w1b, b1b, inv_dim):
    """LayerNorm -> pointwise conv (GLU-split halves) -> GLU, on one piece.

    xp: (rows, D_pad) f32 with zero channel padding; returns (rows, inner_pad).
    """
    s1 = jnp.sum(xp, axis=-1, keepdims=True)
    s2 = jnp.sum(xp * xp, axis=-1, keepdims=True)
    mean = s1 * inv_dim
    var = s2 * inv_dim - mean * mean
    xn = (xp - mean) * jax.lax.rsqrt(var + LN_EPS) * gamma + beta
    xn_bf = xn.astype(jnp.bfloat16)
    a_val = jnp.dot(xn_bf, w1a, preferred_element_type=jnp.float32) + b1a
    gate = jnp.dot(xn_bf, w1b, preferred_element_type=jnp.float32) + b1b
    return a_val * jax.nn.sigmoid(gate)


def conformer_conv_kernel(x_prev_ref, x_cur_ref, x_next_ref,
                          gamma_ref, beta_ref,
                          w1a_ref, b1a_ref, w1b_ref, b1b_ref,
                          dw_w_ref, dw_b_ref, w2_ref, b2_ref,
                          o_ref, g_ref, *, seq_len, halo, dim_true, has_tail):
    t = pl.program_id(1)
    TT = x_cur_ref.shape[1]
    K = dw_w_ref.shape[0]
    inner_p = dw_w_ref.shape[1]
    W = TT + 2 * halo
    inv_dim = 1.0 / float(dim_true)

    gamma = gamma_ref[0]
    beta = beta_ref[0]
    w1a = w1a_ref[...]
    w1b = w1b_ref[...]
    b1a = b1a_ref[0]
    b1b = b1b_ref[0]

    def ln_glu(piece):
        return _ln_glu(piece, gamma, beta, w1a, b1a, w1b, b1b, inv_dim)

    # ---- LayerNorm + conv1 + GLU, piecewise, written into the g scratch ----
    # prev halo: global rows [t*TT - halo, t*TT); invalid (row < 0) only at t==0
    row_p = jax.lax.broadcasted_iota(jnp.int32, (halo, 1), 0) + (t * TT - halo)
    g_ref[pl.ds(0, halo), :] = jnp.where(row_p >= 0, ln_glu(x_prev_ref[0]), 0.0)

    # next halo: global rows [t*TT + TT, t*TT + TT + halo); invalid past seq end
    row_n = jax.lax.broadcasted_iota(jnp.int32, (halo, 1), 0) + (t * TT + TT)
    g_ref[pl.ds(halo + TT, halo), :] = jnp.where(
        row_n < seq_len, ln_glu(x_next_ref[0]), 0.0)

    # main tile: always valid except the padded tail rows of the last tile.
    g_ref[pl.ds(halo, TT), :] = ln_glu(x_cur_ref[0])
    if has_tail:
        @pl.when(t == pl.num_programs(1) - 1)
        def _():
            row_c = jax.lax.broadcasted_iota(jnp.int32, (TT, 1), 0) + t * TT
            cur = g_ref[pl.ds(halo, TT), :]
            g_ref[pl.ds(halo, TT), :] = jnp.where(row_c < seq_len, cur, 0.0)

    # ---- depthwise Conv1d along T ("same"), taps grouped by sublane phase ----
    # out[i] = sum_k g_window[off + k + i] * w[k], off = halo - K//2.
    off = halo - K // 2
    wdw = dw_w_ref[...]                       # (K, inner_p), hoisted
    acc0 = jnp.zeros((TT, inner_p), jnp.float32)
    acc1 = jnp.zeros((TT, inner_p), jnp.float32)
    n_tap = 0
    for p in range(8):                        # sublane phase of the tap start
        starts = [s for s in range(off, off + K) if s % 8 == p]
        if not starts:
            continue
        slab = max(starts) - p + TT
        assert p + slab <= W, "halo too small for phase-grouped taps"
        gp = g_ref[pl.ds(p, slab), :]         # one misaligned load per phase
        for s in starts:                      # 8-aligned slices of the slab
            k = s - off
            contrib = gp[s - p: s - p + TT, :] * wdw[k, :]
            if n_tap % 2 == 0:
                acc0 = acc0 + contrib
            else:
                acc1 = acc1 + contrib
            n_tap += 1
    acc = acc0 + acc1 + dw_b_ref[0]

    # ---- Swish ----
    s_act = acc * jax.nn.sigmoid(acc)

    # ---- pointwise Conv1d(inner -> dim) ----
    out = jnp.dot(s_act.astype(jnp.bfloat16), w2_ref[...],
                  preferred_element_type=jnp.float32) + b2_ref[0]

    # Dropout(p=0.0) is identity in eval mode.
    o_ref[0] = out.astype(o_ref.dtype)


def conformer_conv_module(x, params, tile_t=None):
    """x: (B, T, dim) float32. Returns (B, T, dim)."""
    gamma, beta, w1, b1, dw_w, dw_b, w2, b2 = params
    B, T, D = x.shape
    inner = dw_b.shape[1]
    K = dw_w.shape[0]
    assert K % 2 == 1 and K // 2 <= HALO, "halo must cover the depthwise taps"

    # Lane-dense channel padding (output stores & MXU lanes).
    Dp = pl.cdiv(D, 128) * 128
    Ip = pl.cdiv(inner, 128) * 128

    # Per-generation tile / VMEM budget.
    try:
        vmem_cap = pltpu.get_tpu_info().vmem_capacity_bytes
    except Exception:  # pragma: no cover - conservative fallback
        vmem_cap = 64 * 1024 * 1024
    if tile_t is None:
        tile_t = 512 if vmem_cap >= (100 << 20) else 256
    vmem_limit = min(int(vmem_cap) * 3 // 4, 100 * 1024 * 1024)

    # T tile: multiple of HALO (hence of 8), clamped to the padded sequence.
    tt = max(HALO, (tile_t // HALO) * HALO)
    TT = min(tt, pl.cdiv(T, HALO) * HALO)
    T_pad = pl.cdiv(T, TT) * TT
    n_t = T_pad // TT
    R = TT // HALO
    nb_h = T_pad // HALO

    if (T_pad, Dp) != (T, D):
        x_in = jnp.pad(x, ((0, 0), (0, T_pad - T), (0, Dp - D)))
    else:
        x_in = x

    def pad2(a, r, c):
        return jnp.pad(a, ((0, r - a.shape[0]), (0, c - a.shape[1])))

    # Split the first pointwise conv into its GLU halves; bf16 weights for MXU.
    w1a = pad2(w1[:, :inner], Dp, Ip).astype(jnp.bfloat16)
    w1b = pad2(w1[:, inner:], Dp, Ip).astype(jnp.bfloat16)
    b1a = pad2(b1[:, :inner], 1, Ip)
    b1b = pad2(b1[:, inner:], 1, Ip)
    gamma_p = pad2(gamma, 1, Dp)
    beta_p = pad2(beta, 1, Dp)
    dw_w_p = pad2(dw_w, K, Ip)
    dw_b_p = pad2(dw_b, 1, Ip)
    w2_p = pad2(w2, Ip, Dp).astype(jnp.bfloat16)
    b2_p = pad2(b2, 1, Dp)

    full = lambda a: pl.BlockSpec(a.shape, lambda b, t: (0,) * a.ndim)

    kernel = functools.partial(conformer_conv_kernel, seq_len=T, halo=HALO,
                               dim_true=D, has_tail=(T_pad != T))

    out = pl.pallas_call(
        kernel,
        out_shape=jax.ShapeDtypeStruct((B, T_pad, Dp), x.dtype),
        grid_spec=pltpu.PrefetchScalarGridSpec(
            num_scalar_prefetch=0,
            grid=(B, n_t),
            in_specs=[
                # left halo: last HALO rows of the previous tile (clamped).
                pl.BlockSpec((1, HALO, Dp),
                             lambda b, t: (b, jnp.maximum(t * R - 1, 0), 0)),
                # main tile.
                pl.BlockSpec((1, TT, Dp), lambda b, t: (b, t, 0)),
                # right halo: first HALO rows of the next tile (clamped).
                pl.BlockSpec((1, HALO, Dp),
                             lambda b, t: (b, jnp.minimum(t * R + R, nb_h - 1), 0)),
                full(gamma_p), full(beta_p),
                full(w1a), full(b1a), full(w1b), full(b1b),
                full(dw_w_p), full(dw_b_p),
                full(w2_p), full(b2_p),
            ],
            out_specs=pl.BlockSpec((1, TT, Dp), lambda b, t: (b, t, 0)),
            scratch_shapes=[pltpu.VMEM((TT + 2 * HALO, Ip), jnp.float32)],
        ),
        compiler_params=pltpu.CompilerParams(
            dimension_semantics=("parallel", "parallel"),
            vmem_limit_bytes=vmem_limit),
    )(x_in, x_in, x_in, gamma_p, beta_p, w1a, b1a, w1b, b1b,
      dw_w_p, dw_b_p, w2_p, b2_p)

    if (T_pad, Dp) != (T, D):
        out = out[:, :T, :D]
    return out


def ref_forward(x, params):
    """Pure-JAX reference mirroring the module semantics (and bf16 matmuls)."""
    gamma, beta, w1, b1, dw_w, dw_b, w2, b2 = params
    B, T, D = x.shape
    inner = dw_b.shape[1]
    K = dw_w.shape[0]
    mean = x.mean(-1, keepdims=True)
    var = ((x - mean) ** 2).mean(-1, keepdims=True)
    xn = (x - mean) * jax.lax.rsqrt(var + LN_EPS) * gamma[0] + beta[0]
    xn_bf = xn.astype(jnp.bfloat16)
    a = jnp.dot(xn_bf, w1[:, :inner].astype(jnp.bfloat16),
                preferred_element_type=jnp.float32) + b1[0, :inner]
    bg = jnp.dot(xn_bf, w1[:, inner:].astype(jnp.bfloat16),
                 preferred_element_type=jnp.float32) + b1[0, inner:]
    g = a * jax.nn.sigmoid(bg)
    pad_l, pad_r = K // 2, K // 2 - (K + 1) % 2
    gp = jnp.pad(g, ((0, 0), (pad_l, pad_r), (0, 0)))
    acc = sum(gp[:, k:k + T, :] * dw_w[k] for k in range(K)) + dw_b[0]
    s = acc * jax.nn.sigmoid(acc)
    return jnp.dot(s.astype(jnp.bfloat16), w2.astype(jnp.bfloat16),
                   preferred_element_type=jnp.float32) + b2[0]


def init_params(key, dim, expansion_factor=2, kernel_size=31):
    inner = dim * expansion_factor
    ks = jax.random.split(key, 6)
    gamma = jnp.ones((1, dim), jnp.float32)
    beta = jnp.zeros((1, dim), jnp.float32)
    # pointwise conv1 (dim -> 2*inner): W1[in, out]
    w1 = jax.random.normal(ks[0], (dim, 2 * inner), jnp.float32) * 0.05
    b1 = jax.random.normal(ks[1], (1, 2 * inner), jnp.float32) * 0.01
    # depthwise conv: dw_w[k, c] == torch weight[c, 0, k]
    dw_w = jax.random.normal(ks[2], (kernel_size, inner), jnp.float32) * 0.05
    dw_b = jax.random.normal(ks[3], (1, inner), jnp.float32) * 0.01
    # pointwise conv2 (inner -> dim): W2[in, out]
    w2 = jax.random.normal(ks[4], (inner, dim), jnp.float32) * 0.05
    b2 = jax.random.normal(ks[5], (1, dim), jnp.float32) * 0.01
    return (gamma, beta, w1, b1, dw_w, dw_b, w2, b2)


if __name__ == "__main__":
    B, T, dim = 2, 64, 32
    key = jax.random.PRNGKey(0)
    kx, kp = jax.random.split(key)
    x = jax.random.normal(kx, (B, T, dim), jnp.float32)
    params = init_params(kp, dim)

    # tile_t=32 forces the multi-tile + halo path even at this small T.
    out = conformer_conv_module(x, params, tile_t=32)
    out = jax.block_until_ready(out)

    ref = ref_forward(x, params)
    assert out.shape == (B, T, dim)
    err = float(jnp.max(jnp.abs(out - ref)))
    assert jnp.allclose(out, ref, atol=2e-3, rtol=2e-3), f"max abs err {err}"
    print("KERNEL_OK")
</pallas_src>

<mosaic_0001>
module attributes {stable_mosaic.version = 11 : i64} {
  func.func @conformer_conv_kernel(%arg0: i32, %arg1: i32, %arg2: memref<1x16x128xf32, #tpu.memory_space<vmem>>, %arg3: memref<1x32x128xf32, #tpu.memory_space<vmem>>, %arg4: memref<1x16x128xf32, #tpu.memory_space<vmem>>, %arg5: memref<1x128xf32, #tpu.memory_space<vmem>>, %arg6: memref<1x128xf32, #tpu.memory_space<vmem>>, %arg7: memref<128x128xbf16, #tpu.memory_space<vmem>>, %arg8: memref<1x128xf32, #tpu.memory_space<vmem>>, %arg9: memref<128x128xbf16, #tpu.memory_space<vmem>>, %arg10: memref<1x128xf32, #tpu.memory_space<vmem>>, %arg11: memref<31x128xf32, #tpu.memory_space<vmem>>, %arg12: memref<1x128xf32, #tpu.memory_space<vmem>>, %arg13: memref<128x128xbf16, #tpu.memory_space<vmem>>, %arg14: memref<1x128xf32, #tpu.memory_space<vmem>>, %arg15: memref<1x32x128xf32, #tpu.memory_space<vmem>>, %arg16: memref<64x128xf32, #tpu.memory_space<vmem>>) attributes {dimension_semantics = [#tpu.dimension_semantics<parallel>, #tpu.dimension_semantics<parallel>], iteration_bounds = array<i64: 2, 2>, scalar_prefetch = 0 : i64, scratch_operands = 1 : i64, tpu.core_type = #tpu.core_type<tc>, window_params = [{transform_indices = @transform_0, window_bounds = array<i64: 1, 16, 128>}, {transform_indices = @transform_1, window_bounds = array<i64: 1, 32, 128>}, {transform_indices = @transform_2, window_bounds = array<i64: 1, 16, 128>}, {pipeline_mode = #tpu.pipeline_mode<synchronous>, transform_indices = @transform_3, window_bounds = array<i64: 1, 128>}, {pipeline_mode = #tpu.pipeline_mode<synchronous>, transform_indices = @transform_4, window_bounds = array<i64: 1, 128>}, {pipeline_mode = #tpu.pipeline_mode<synchronous>, transform_indices = @transform_5, window_bounds = array<i64: 128, 128>}, {pipeline_mode = #tpu.pipeline_mode<synchronous>, transform_indices = @transform_6, window_bounds = array<i64: 1, 128>}, {pipeline_mode = #tpu.pipeline_mode<synchronous>, transform_indices = @transform_7, window_bounds = array<i64: 128, 128>}, {pipeline_mode = #tpu.pipeline_mode<synchronous>, transform_indices = @transform_8, window_bounds = array<i64: 1, 128>}, {pipeline_mode = #tpu.pipeline_mode<synchronous>, transform_indices = @transform_9, window_bounds = array<i64: 31, 128>}, {pipeline_mode = #tpu.pipeline_mode<synchronous>, transform_indices = @transform_10, window_bounds = array<i64: 1, 128>}, {pipeline_mode = #tpu.pipeline_mode<synchronous>, transform_indices = @transform_11, window_bounds = array<i64: 128, 128>}, {pipeline_mode = #tpu.pipeline_mode<synchronous>, transform_indices = @transform_12, window_bounds = array<i64: 1, 128>}, {transform_indices = @transform_13, window_bounds = array<i64: 1, 32, 128>}]} {
    %c0 = arith.constant 0 : index
    %c0_0 = arith.constant 0 : index
    %0 = vector.load %arg5[%c0, %c0_0] : memref<1x128xf32, #tpu.memory_space<vmem>>, vector<1x128xf32>
    %1 = vector.shape_cast %0 : vector<1x128xf32> to vector<128xf32>
    %c0_1 = arith.constant 0 : index
    %c0_2 = arith.constant 0 : index
    %2 = vector.load %arg6[%c0_1, %c0_2] : memref<1x128xf32, #tpu.memory_space<vmem>>, vector<1x128xf32>
    %3 = vector.shape_cast %2 : vector<1x128xf32> to vector<128xf32>
    %c0_3 = arith.constant 0 : index
    %c0_4 = arith.constant 0 : index
    %4 = vector.load %arg7[%c0_3, %c0_4] : memref<128x128xbf16, #tpu.memory_space<vmem>>, vector<128x128xbf16>
    %c0_5 = arith.constant 0 : index
    %c0_6 = arith.constant 0 : index
    %5 = vector.load %arg9[%c0_5, %c0_6] : memref<128x128xbf16, #tpu.memory_space<vmem>>, vector<128x128xbf16>
    %c0_7 = arith.constant 0 : index
    %c0_8 = arith.constant 0 : index
    %6 = vector.load %arg8[%c0_7, %c0_8] : memref<1x128xf32, #tpu.memory_space<vmem>>, vector<1x128xf32>
    %7 = vector.shape_cast %6 : vector<1x128xf32> to vector<128xf32>
    %c0_9 = arith.constant 0 : index
    %c0_10 = arith.constant 0 : index
    %8 = vector.load %arg10[%c0_9, %c0_10] : memref<1x128xf32, #tpu.memory_space<vmem>>, vector<1x128xf32>
    %9 = vector.shape_cast %8 : vector<1x128xf32> to vector<128xf32>
    %10 = tpu.iota {dimensions = array<i32: 0>} : vector<16x1xi32>
    %c32_i32 = arith.constant 32 : i32
    %11 = arith.muli %arg1, %c32_i32 : i32
    %c16_i32 = arith.constant 16 : i32
    %12 = arith.subi %11, %c16_i32 : i32
    %13 = vector.broadcast %12 : i32 to vector<16x1xi32>
    %14 = arith.addi %10, %13 : vector<16x1xi32>
    %c0_i32 = arith.constant 0 : i32
    %15 = vector.broadcast %c0_i32 : i32 to vector<16x1xi32>
    %16 = arith.cmpi sge, %14, %15 : vector<16x1xi32>
    %c0_11 = arith.constant 0 : index
    %c0_12 = arith.constant 0 : index
    %c0_13 = arith.constant 0 : index
    %17 = vector.load %arg2[%c0_11, %c0_12, %c0_13] : memref<1x16x128xf32, #tpu.memory_space<vmem>>, vector<1x16x128xf32>
    %18 = vector.shape_cast %17 : vector<1x16x128xf32> to vector<16x128xf32>
    %cst = arith.constant dense<0.000000e+00> : vector<16xf32>
    %19 = vector.multi_reduction <add>, %18, %cst [1] : vector<16x128xf32> to vector<16xf32>
    %20 = vector.shape_cast %19 : vector<16xf32> to vector<16x1xf32>
    %21 = arith.mulf %18, %18 : vector<16x128xf32>
    %cst_14 = arith.constant dense<0.000000e+00> : vector<16xf32>
    %22 = vector.multi_reduction <add>, %21, %cst_14 [1] : vector<16x128xf32> to vector<16xf32>
    %23 = vector.shape_cast %22 : vector<16xf32> to vector<16x1xf32>
    %cst_15 = arith.constant 3.125000e-02 : f32
    %24 = vector.broadcast %cst_15 : f32 to vector<16x1xf32>
    %25 = arith.mulf %20, %24 : vector<16x1xf32>
    %cst_16 = arith.constant 3.125000e-02 : f32
    %26 = vector.broadcast %cst_16 : f32 to vector<16x1xf32>
    %27 = arith.mulf %23, %26 : vector<16x1xf32>
    %28 = arith.mulf %25, %25 : vector<16x1xf32>
    %29 = arith.subf %27, %28 : vector<16x1xf32>
    %30 = vector.broadcast %25 : vector<16x1xf32> to vector<16x128xf32>
    %31 = arith.subf %18, %30 : vector<16x128xf32>
    %cst_17 = arith.constant 9.99999974E-6 : f32
    %32 = vector.broadcast %cst_17 : f32 to vector<16x1xf32>
    %33 = arith.addf %29, %32 : vector<16x1xf32>
    %34 = math.rsqrt %33 : vector<16x1xf32>
    %35 = vector.broadcast %34 : vector<16x1xf32> to vector<16x128xf32>
    %36 = arith.mulf %31, %35 : vector<16x128xf32>
    %37 = vector.shape_cast %1 : vector<128xf32> to vector<1x128xf32>
    %38 = vector.broadcast %37 : vector<1x128xf32> to vector<16x128xf32>
    %39 = arith.mulf %36, %38 : vector<16x128xf32>
    %40 = vector.shape_cast %3 : vector<128xf32> to vector<1x128xf32>
    %41 = vector.broadcast %40 : vector<1x128xf32> to vector<16x128xf32>
    %42 = arith.addf %39, %41 : vector<16x128xf32>
    %43 = arith.truncf %42 : vector<16x128xf32> to vector<16x128xbf16>
    %cst_18 = arith.constant dense<0.000000e+00> : vector<16x128xf32>
    %44 = tpu.matmul %43, %4, %cst_18 {dimension_numbers = #tpu.dot_dimension_numbers<[1], [0], [0], [1], [0, 0, 1, 1], [], []>} : vector<16x128xbf16>, vector<128x128xbf16>, vector<16x128xf32> -> vector<16x128xf32>
    %45 = vector.shape_cast %7 : vector<128xf32> to vector<1x128xf32>
    %46 = vector.broadcast %45 : vector<1x128xf32> to vector<16x128xf32>
    %47 = arith.addf %44, %46 : vector<16x128xf32>
    %cst_19 = arith.constant dense<0.000000e+00> : vector<16x128xf32>
    %48 = tpu.matmul %43, %5, %cst_19 {dimension_numbers = #tpu.dot_dimension_numbers<[1], [0], [0], [1], [0, 0, 1, 1], [], []>} : vector<16x128xbf16>, vector<128x128xbf16>, vector<16x128xf32> -> vector<16x128xf32>
    %49 = vector.shape_cast %9 : vector<128xf32> to vector<1x128xf32>
    %50 = vector.broadcast %49 : vector<1x128xf32> to vector<16x128xf32>
    %51 = arith.addf %48, %50 : vector<16x128xf32>
    %52 = arith.negf %51 : vector<16x128xf32>
    %53 = math.exp %52 : vector<16x128xf32>
    %cst_20 = arith.constant 1.000000e+00 : f32
    %54 = vector.broadcast %cst_20 : f32 to vector<16x128xf32>
    %55 = arith.addf %54, %53 : vector<16x128xf32>
    %56 = arith.divf %54, %55 : vector<16x128xf32>
    %57 = arith.mulf %47, %56 : vector<16x128xf32>
    %cst_21 = arith.constant 0.000000e+00 : f32
    %58 = vector.shape_cast %16 : vector<16x1xi1> to vector<16x1xi1>
    %59 = vector.broadcast %58 : vector<16x1xi1> to vector<16x128xi1>
    %60 = vector.broadcast %cst_21 : f32 to vector<16x128xf32>
    %61 = arith.select %59, %57, %60 : vector<16x128xi1>, vector<16x128xf32>
    %c0_22 = arith.constant 0 : index
    %c0_23 = arith.constant 0 : index
    %62 = vector.load %arg16[%c0_22, %c0_23] : memref<64x128xf32, #tpu.memory_space<vmem>>, vector<16x128xf32>
    tpu.vector_store %arg16[%c0_22, %c0_23], %61 {strides = array<i32>} : memref<64x128xf32, #tpu.memory_space<vmem>>, vector<16x128xf32>,
    %63 = tpu.iota {dimensions = array<i32: 0>} : vector<16x1xi32>
    %c32_i32_24 = arith.constant 32 : i32
    %64 = arith.muli %arg1, %c32_i32_24 : i32
    %c32_i32_25 = arith.constant 32 : i32
    %65 = arith.addi %64, %c32_i32_25 : i32
    %66 = vector.broadcast %65 : i32 to vector<16x1xi32>
    %67 = arith.addi %63, %66 : vector<16x1xi32>
    %c64_i32 = arith.constant 64 : i32
    %68 = vector.broadcast %c64_i32 : i32 to vector<16x1xi32>
    %69 = arith.cmpi slt, %67, %68 : vector<16x1xi32>
    %c0_26 = arith.constant 0 : index
    %c0_27 = arith.constant 0 : index
    %c0_28 = arith.constant 0 : index
    %70 = vector.load %arg4[%c0_26, %c0_27, %c0_28] : memref<1x16x128xf32, #tpu.memory_space<vmem>>, vector<1x16x128xf32>
    %71 = vector.shape_cast %70 : vector<1x16x128xf32> to vector<16x128xf32>
    %cst_29 = arith.constant dense<0.000000e+00> : vector<16xf32>
    %72 = vector.multi_reduction <add>, %71, %cst_29 [1] : vector<16x128xf32> to vector<16xf32>
    %73 = vector.shape_cast %72 : vector<16xf32> to vector<16x1xf32>
    %74 = arith.mulf %71, %71 : vector<16x128xf32>
    %cst_30 = arith.constant dense<0.000000e+00> : vector<16xf32>
    %75 = vector.multi_reduction <add>, %74, %cst_30 [1] : vector<16x128xf32> to vector<16xf32>
    %76 = vector.shape_cast %75 : vector<16xf32> to vector<16x1xf32>
    %cst_31 = arith.constant 3.125000e-02 : f32
    %77 = vector.broadcast %cst_31 : f32 to vector<16x1xf32>
    %78 = arith.mulf %73, %77 : vector<16x1xf32>
    %cst_32 = arith.constant 3.125000e-02 : f32
    %79 = vector.broadcast %cst_32 : f32 to vector<16x1xf32>
    %80 = arith.mulf %76, %79 : vector<16x1xf32>
    %81 = arith.mulf %78, %78 : vector<16x1xf32>
    %82 = arith.subf %80, %81 : vector<16x1xf32>
    %83 = vector.broadcast %78 : vector<16x1xf32> to vector<16x128xf32>
    %84 = arith.subf %71, %83 : vector<16x128xf32>
    %cst_33 = arith.constant 9.99999974E-6 : f32
    %85 = vector.broadcast %cst_33 : f32 to vector<16x1xf32>
    %86 = arith.addf %82, %85 : vector<16x1xf32>
    %87 = math.rsqrt %86 : vector<16x1xf32>
    %88 = vector.broadcast %87 : vector<16x1xf32> to vector<16x128xf32>
    %89 = arith.mulf %84, %88 : vector<16x128xf32>
    %90 = vector.shape_cast %1 : vector<128xf32> to vector<1x128xf32>
    %91 = vector.broadcast %90 : vector<1x128xf32> to vector<16x128xf32>
    %92 = arith.mulf %89, %91 : vector<16x128xf32>
    %93 = vector.shape_cast %3 : vector<128xf32> to vector<1x128xf32>
    %94 = vector.broadcast %93 : vector<1x128xf32> to vector<16x128xf32>
    %95 = arith.addf %92, %94 : vector<16x128xf32>
    %96 = arith.truncf %95 : vector<16x128xf32> to vector<16x128xbf16>
    %cst_34 = arith.constant dense<0.000000e+00> : vector<16x128xf32>
    %97 = tpu.matmul %96, %4, %cst_34 {dimension_numbers = #tpu.dot_dimension_numbers<[1], [0], [0], [1], [0, 0, 1, 1], [], []>} : vector<16x128xbf16>, vector<128x128xbf16>, vector<16x128xf32> -> vector<16x128xf32>
    %98 = vector.shape_cast %7 : vector<128xf32> to vector<1x128xf32>
    %99 = vector.broadcast %98 : vector<1x128xf32> to vector<16x128xf32>
    %100 = arith.addf %97, %99 : vector<16x128xf32>
    %cst_35 = arith.constant dense<0.000000e+00> : vector<16x128xf32>
    %101 = tpu.matmul %96, %5, %cst_35 {dimension_numbers = #tpu.dot_dimension_numbers<[1], [0], [0], [1], [0, 0, 1, 1], [], []>} : vector<16x128xbf16>, vector<128x128xbf16>, vector<16x128xf32> -> vector<16x128xf32>
    %102 = vector.shape_cast %9 : vector<128xf32> to vector<1x128xf32>
    %103 = vector.broadcast %102 : vector<1x128xf32> to vector<16x128xf32>
    %104 = arith.addf %101, %103 : vector<16x128xf32>
    %105 = arith.negf %104 : vector<16x128xf32>
    %106 = math.exp %105 : vector<16x128xf32>
    %cst_36 = arith.constant 1.000000e+00 : f32
    %107 = vector.broadcast %cst_36 : f32 to vector<16x128xf32>
    %108 = arith.addf %107, %106 : vector<16x128xf32>
    %109 = arith.divf %107, %108 : vector<16x128xf32>
    %110 = arith.mulf %100, %109 : vector<16x128xf32>
    %cst_37 = arith.constant 0.000000e+00 : f32
    %111 = vector.shape_cast %69 : vector<16x1xi1> to vector<16x1xi1>
    %112 = vector.broadcast %111 : vector<16x1xi1> to vector<16x128xi1>
    %113 = vector.broadcast %cst_37 : f32 to vector<16x128xf32>
    %114 = arith.select %112, %110, %113 : vector<16x128xi1>, vector<16x128xf32>
    %c48 = arith.constant 48 : index
    %c0_38 = arith.constant 0 : index
    %115 = vector.load %arg16[%c48, %c0_38] : memref<64x128xf32, #tpu.memory_space<vmem>>, vector<16x128xf32>
    tpu.vector_store %arg16[%c48, %c0_38], %114 {strides = array<i32>} : memref<64x128xf32, #tpu.memory_space<vmem>>, vector<16x128xf32>,
    %c0_39 = arith.constant 0 : index
    %c0_40 = arith.constant 0 : index
    %c0_41 = arith.constant 0 : index
    %116 = vector.load %arg3[%c0_39, %c0_40, %c0_41] : memref<1x32x128xf32, #tpu.memory_space<vmem>>, vector<1x32x128xf32>
    %117 = vector.shape_cast %116 : vector<1x32x128xf32> to vector<32x128xf32>
    %cst_42 = arith.constant dense<0.000000e+00> : vector<32xf32>
    %118 = vector.multi_reduction <add>, %117, %cst_42 [1] : vector<32x128xf32> to vector<32xf32>
    %119 = vector.shape_cast %118 : vector<32xf32> to vector<32x1xf32>
    %120 = arith.mulf %117, %117 : vector<32x128xf32>
    %cst_43 = arith.constant dense<0.000000e+00> : vector<32xf32>
    %121 = vector.multi_reduction <add>, %120, %cst_43 [1] : vector<32x128xf32> to vector<32xf32>
    %122 = vector.shape_cast %121 : vector<32xf32> to vector<32x1xf32>
    %cst_44 = arith.constant 3.125000e-02 : f32
    %123 = vector.broadcast %cst_44 : f32 to vector<32x1xf32>
    %124 = arith.mulf %119, %123 : vector<32x1xf32>
    %cst_45 = arith.constant 3.125000e-02 : f32
    %125 = vector.broadcast %cst_45 : f32 to vector<32x1xf32>
    %126 = arith.mulf %122, %125 : vector<32x1xf32>
    %127 = arith.mulf %124, %124 : vector<32x1xf32>
    %128 = arith.subf %126, %127 : vector<32x1xf32>
    %129 = vector.broadcast %124 : vector<32x1xf32> to vector<32x128xf32>
    %130 = arith.subf %117, %129 : vector<32x128xf32>
    %cst_46 = arith.constant 9.99999974E-6 : f32
    %131 = vector.broadcast %cst_46 : f32 to vector<32x1xf32>
    %132 = arith.addf %128, %131 : vector<32x1xf32>
    %133 = math.rsqrt %132 : vector<32x1xf32>
    %134 = vector.broadcast %133 : vector<32x1xf32> to vector<32x128xf32>
    %135 = arith.mulf %130, %134 : vector<32x128xf32>
    %136 = vector.shape_cast %1 : vector<128xf32> to vector<1x128xf32>
    %137 = vector.broadcast %136 : vector<1x128xf32> to vector<32x128xf32>
    %138 = arith.mulf %135, %137 : vector<32x128xf32>
    %139 = vector.shape_cast %3 : vector<128xf32> to vector<1x128xf32>
    %140 = vector.broadcast %139 : vector<1x128xf32> to vector<32x128xf32>
    %141 = arith.addf %138, %140 : vector<32x128xf32>
    %142 = arith.truncf %141 : vector<32x128xf32> to vector<32x128xbf16>
    %cst_47 = arith.constant dense<0.000000e+00> : vector<32x128xf32>
    %143 = tpu.matmul %142, %4, %cst_47 {dimension_numbers = #tpu.dot_dimension_numbers<[1], [0], [0], [1], [0, 0, 1, 1], [], []>} : vector<32x128xbf16>, vector<128x128xbf16>, vector<32x128xf32> -> vector<32x128xf32>
    %144 = vector.shape_cast %7 : vector<128xf32> to vector<1x128xf32>
    %145 = vector.broadcast %144 : vector<1x128xf32> to vector<32x128xf32>
    %146 = arith.addf %143, %145 : vector<32x128xf32>
    %cst_48 = arith.constant dense<0.000000e+00> : vector<32x128xf32>
    %147 = tpu.matmul %142, %5, %cst_48 {dimension_numbers = #tpu.dot_dimension_numbers<[1], [0], [0], [1], [0, 0, 1, 1], [], []>} : vector<32x128xbf16>, vector<128x128xbf16>, vector<32x128xf32> -> vector<32x128xf32>
    %148 = vector.shape_cast %9 : vector<128xf32> to vector<1x128xf32>
    %149 = vector.broadcast %148 : vector<1x128xf32> to vector<32x128xf32>
    %150 = arith.addf %147, %149 : vector<32x128xf32>
    %151 = arith.negf %150 : vector<32x128xf32>
    %152 = math.exp %151 : vector<32x128xf32>
    %cst_49 = arith.constant 1.000000e+00 : f32
    %153 = vector.broadcast %cst_49 : f32 to vector<32x128xf32>
    %154 = arith.addf %153, %152 : vector<32x128xf32>
    %155 = arith.divf %153, %154 : vector<32x128xf32>
    %156 = arith.mulf %146, %155 : vector<32x128xf32>
    %c16 = arith.constant 16 : index
    %c0_50 = arith.constant 0 : index
    %157 = vector.load %arg16[%c16, %c0_50] : memref<64x128xf32, #tpu.memory_space<vmem>>, vector<32x128xf32>
    tpu.vector_store %arg16[%c16, %c0_50], %156 {strides = array<i32>} : memref<64x128xf32, #tpu.memory_space<vmem>>, vector<32x128xf32>,
    %c0_51 = arith.constant 0 : index
    %c0_52 = arith.constant 0 : index
    %158 = vector.load %arg11[%c0_51, %c0_52] : memref<31x128xf32, #tpu.memory_space<vmem>>, vector<31x128xf32>
    %cst_53 = arith.constant 0.000000e+00 : f32
    %159 = vector.broadcast %cst_53 : f32 to vector<32x128xf32>
    %cst_54 = arith.constant 0.000000e+00 : f32
    %160 = vector.broadcast %cst_54 : f32 to vector<32x128xf32>
    %c0_55 = arith.constant 0 : index
    %c0_56 = arith.constant 0 : index
    %161 = vector.load %arg16[%c0_55, %c0_56] : memref<64x128xf32, #tpu.memory_space<vmem>>, vector<56x128xf32>
    %162 = vector.extract_strided_slice %161 {offsets = [8, 0], sizes = [32, 128], strides = [1, 1]} : vector<56x128xf32> to vector<32x128xf32>
    %163 = vector.extract_strided_slice %158 {offsets = [7, 0], sizes = [1, 128], strides = [1, 1]} : vector<31x128xf32> to vector<1x128xf32>
    %164 = vector.shape_cast %163 : vector<1x128xf32> to vector<128xf32>
    %165 = vector.shape_cast %164 : vector<128xf32> to vector<1x128xf32>
    %166 = vector.broadcast %165 : vector<1x128xf32> to vector<32x128xf32>
    %167 = arith.mulf %162, %166 : vector<32x128xf32>
    %168 = arith.addf %159, %167 : vector<32x128xf32>
    %169 = vector.extract_strided_slice %161 {offsets = [16, 0], sizes = [32, 128], strides = [1, 1]} : vector<56x128xf32> to vector<32x128xf32>
    %170 = vector.extract_strided_slice %158 {offsets = [15, 0], sizes = [1, 128], strides = [1, 1]} : vector<31x128xf32> to vector<1x128xf32>
    %171 = vector.shape_cast %170 : vector<1x128xf32> to vector<128xf32>
    %172 = vector.shape_cast %171 : vector<128xf32> to vector<1x128xf32>
    %173 = vector.broadcast %172 : vector<1x128xf32> to vector<32x128xf32>
    %174 = arith.mulf %169, %173 : vector<32x128xf32>
    %175 = arith.addf %160, %174 : vector<32x128xf32>
    %176 = vector.extract_strided_slice %161 {offsets = [24, 0], sizes = [32, 128], strides = [1, 1]} : vector<56x128xf32> to vector<32x128xf32>
    %177 = vector.extract_strided_slice %158 {offsets = [23, 0], sizes = [1, 128], strides = [1, 1]} : vector<31x128xf32> to vector<1x128xf32>
    %178 = vector.shape_cast %177 : vector<1x128xf32> to vector<128xf32>
    %179 = vector.shape_cast %178 : vector<128xf32> to vector<1x128xf32>
    %180 = vector.broadcast %179 : vector<1x128xf32> to vector<32x128xf32>
    %181 = arith.mulf %176, %180 : vector<32x128xf32>
    %182 = arith.addf %168, %181 : vector<32x128xf32>
    %c1 = arith.constant 1 : index
    %c0_57 = arith.constant 0 : index
    %183 = vector.load %arg16[%c1, %c0_57] : memref<64x128xf32, #tpu.memory_space<vmem>>, vector<56x128xf32>
    %184 = vector.extract_strided_slice %183 {offsets = [0, 0], sizes = [32, 128], strides = [1, 1]} : vector<56x128xf32> to vector<32x128xf32>
    %185 = vector.extract_strided_slice %158 {offsets = [0, 0], sizes = [1, 128], strides = [1, 1]} : vector<31x128xf32> to vector<1x128xf32>
    %186 = vector.shape_cast %185 : vector<1x128xf32> to vector<128xf32>
    %187 = vector.shape_cast %186 : vector<128xf32> to vector<1x128xf32>
    %188 = vector.broadcast %187 : vector<1x128xf32> to vector<32x128xf32>
    %189 = arith.mulf %184, %188 : vector<32x128xf32>
    %190 = arith.addf %175, %189 : vector<32x128xf32>
    %191 = vector.extract_strided_slice %183 {offsets = [8, 0], sizes = [32, 128], strides = [1, 1]} : vector<56x128xf32> to vector<32x128xf32>
    %192 = vector.extract_strided_slice %158 {offsets = [8, 0], sizes = [1, 128], strides = [1, 1]} : vector<31x128xf32> to vector<1x128xf32>
    %193 = vector.shape_cast %192 : vector<1x128xf32> to vector<128xf32>
    %194 = vector.shape_cast %193 : vector<128xf32> to vector<1x128xf32>
    %195 = vector.broadcast %194 : vector<1x128xf32> to vector<32x128xf32>
    %196 = arith.mulf %191, %195 : vector<32x128xf32>
    %197 = arith.addf %182, %196 : vector<32x128xf32>
    %198 = vector.extract_strided_slice %183 {offsets = [16, 0], sizes = [32, 128], strides = [1, 1]} : vector<56x128xf32> to vector<32x128xf32>
    %199 = vector.extract_strided_slice %158 {offsets = [16, 0], sizes = [1, 128], strides = [1, 1]} : vector<31x128xf32> to vector<1x128xf32>
    %200 = vector.shape_cast %199 : vector<1x128xf32> to vector<128xf32>
    %201 = vector.shape_cast %200 : vector<128xf32> to vector<1x128xf32>
    %202 = vector.broadcast %201 : vector<1x128xf32> to vector<32x128xf32>
    %203 = arith.mulf %198, %202 : vector<32x128xf32>
    %204 = arith.addf %190, %203 : vector<32x128xf32>
    %205 = vector.extract_strided_slice %183 {offsets = [24, 0], sizes = [32, 128], strides = [1, 1]} : vector<56x128xf32> to vector<32x128xf32>
    %206 = vector.extract_strided_slice %158 {offsets = [24, 0], sizes = [1, 128], strides = [1, 1]} : vector<31x128xf32> to vector<1x128xf32>
    %207 = vector.shape_cast %206 : vector<1x128xf32> to vector<128xf32>
    %208 = vector.shape_cast %207 : vector<128xf32> to vector<1x128xf32>
    %209 = vector.broadcast %208 : vector<1x128xf32> to vector<32x128xf32>
    %210 = arith.mulf %205, %209 : vector<32x128xf32>
    %211 = arith.addf %197, %210 : vector<32x128xf32>
    %c2 = arith.constant 2 : index
    %c0_58 = arith.constant 0 : index
    %212 = vector.load %arg16[%c2, %c0_58] : memref<64x128xf32, #tpu.memory_space<vmem>>, vector<56x128xf32>
    %213 = vector.extract_strided_slice %212 {offsets = [0, 0], sizes = [32, 128], strides = [1, 1]} : vector<56x128xf32> to vector<32x128xf32>
    %214 = vector.extract_strided_slice %158 {offsets = [1, 0], sizes = [1, 128], strides = [1, 1]} : vector<31x128xf32> to vector<1x128xf32>
    %215 = vector.shape_cast %214 : vector<1x128xf32> to vector<128xf32>
    %216 = vector.shape_cast %215 : vector<128xf32> to vector<1x128xf32>
    %217 = vector.broadcast %216 : vector<1x128xf32> to vector<32x128xf32>
    %218 = arith.mulf %213, %217 : vector<32x128xf32>
    %219 = arith.addf %204, %218 : vector<32x128xf32>
    %220 = vector.extract_strided_slice %212 {offsets = [8, 0], sizes = [32, 128], strides = [1, 1]} : vector<56x128xf32> to vector<32x128xf32>
    %221 = vector.extract_strided_slice %158 {offsets = [9, 0], sizes = [1, 128], strides = [1, 1]} : vector<31x128xf32> to vector<1x128xf32>
    %222 = vector.shape_cast %221 : vector<1x128xf32> to vector<128xf32>
    %223 = vector.shape_cast %222 : vector<128xf32> to vector<1x128xf32>
    %224 = vector.broadcast %223 : vector<1x128xf32> to vector<32x128xf32>
    %225 = arith.mulf %220, %224 : vector<32x128xf32>
    %226 = arith.addf %211, %225 : vector<32x128xf32>
    %227 = vector.extract_strided_slice %212 {offsets = [16, 0], sizes = [32, 128], strides = [1, 1]} : vector<56x128xf32> to vector<32x128xf32>
    %228 = vector.extract_strided_slice %158 {offsets = [17, 0], sizes = [1, 128], strides = [1, 1]} : vector<31x128xf32> to vector<1x128xf32>
    %229 = vector.shape_cast %228 : vector<1x128xf32> to vector<128xf32>
    %230 = vector.shape_cast %229 : vector<128xf32> to vector<1x128xf32>
    %231 = vector.broadcast %230 : vector<1x128xf32> to vector<32x128xf32>
    %232 = arith.mulf %227, %231 : vector<32x128xf32>
    %233 = arith.addf %219, %232 : vector<32x128xf32>
    %234 = vector.extract_strided_slice %212 {offsets = [24, 0], sizes = [32, 128], strides = [1, 1]} : vector<56x128xf32> to vector<32x128xf32>
    %235 = vector.extract_strided_slice %158 {offsets = [25, 0], sizes = [1, 128], strides = [1, 1]} : vector<31x128xf32> to vector<1x128xf32>
    %236 = vector.shape_cast %235 : vector<1x128xf32> to vector<128xf32>
    %237 = vector.shape_cast %236 : vector<128xf32> to vector<1x128xf32>
    %238 = vector.broadcast %237 : vector<1x128xf32> to vector<32x128xf32>
    %239 = arith.mulf %234, %238 : vector<32x128xf32>
    %240 = arith.addf %226, %239 : vector<32x128xf32>
    %c3 = arith.constant 3 : index
    %c0_59 = arith.constant 0 : index
    %241 = vector.load %arg16[%c3, %c0_59] : memref<64x128xf32, #tpu.memory_space<vmem>>, vector<56x128xf32>
    %242 = vector.extract_strided_slice %241 {offsets = [0, 0], sizes = [32, 128], strides = [1, 1]} : vector<56x128xf32> to vector<32x128xf32>
    %243 = vector.extract_strided_slice %158 {offsets = [2, 0], sizes = [1, 128], strides = [1, 1]} : vector<31x128xf32> to vector<1x128xf32>
    %244 = vector.shape_cast %243 : vector<1x128xf32> to vector<128xf32>
    %245 = vector.shape_cast %244 : vector<128xf32> to vector<1x128xf32>
    %246 = vector.broadcast %245 : vector<1x128xf32> to vector<32x128xf32>
    %247 = arith.mulf %242, %246 : vector<32x128xf32>
    %248 = arith.addf %233, %247 : vector<32x128xf32>
    %249 = vector.extract_strided_slice %241 {offsets = [8, 0], sizes = [32, 128], strides = [1, 1]} : vector<56x128xf32> to vector<32x128xf32>
    %250 = vector.extract_strided_slice %158 {offsets = [10, 0], sizes = [1, 128], strides = [1, 1]} : vector<31x128xf32> to vector<1x128xf32>
    %251 = vector.shape_cast %250 : vector<1x128xf32> to vector<128xf32>
    %252 = vector.shape_cast %251 : vector<128xf32> to vector<1x128xf32>
    %253 = vector.broadcast %252 : vector<1x128xf32> to vector<32x128xf32>
    %254 = arith.mulf %249, %253 : vector<32x128xf32>
    %255 = arith.addf %240, %254 : vector<32x128xf32>
    %256 = vector.extract_strided_slice %241 {offsets = [16, 0], sizes = [32, 128], strides = [1, 1]} : vector<56x128xf32> to vector<32x128xf32>
    %257 = vector.extract_strided_slice %158 {offsets = [18, 0], sizes = [1, 128], strides = [1, 1]} : vector<31x128xf32> to vector<1x128xf32>
    %258 = vector.shape_cast %257 : vector<1x128xf32> to vector<128xf32>
    %259 = vector.shape_cast %258 : vector<128xf32> to vector<1x128xf32>
    %260 = vector.broadcast %259 : vector<1x128xf32> to vector<32x128xf32>
    %261 = arith.mulf %256, %260 : vector<32x128xf32>
    %262 = arith.addf %248, %261 : vector<32x128xf32>
    %263 = vector.extract_strided_slice %241 {offsets = [24, 0], sizes = [32, 128], strides = [1, 1]} : vector<56x128xf32> to vector<32x128xf32>
    %264 = vector.extract_strided_slice %158 {offsets = [26, 0], sizes = [1, 128], strides = [1, 1]} : vector<31x128xf32> to vector<1x128xf32>
    %265 = vector.shape_cast %264 : vector<1x128xf32> to vector<128xf32>
    %266 = vector.shape_cast %265 : vector<128xf32> to vector<1x128xf32>
    %267 = vector.broadcast %266 : vector<1x128xf32> to vector<32x128xf32>
    %268 = arith.mulf %263, %267 : vector<32x128xf32>
    %269 = arith.addf %255, %268 : vector<32x128xf32>
    %c4 = arith.constant 4 : index
    %c0_60 = arith.constant 0 : index
    %270 = vector.load %arg16[%c4, %c0_60] : memref<64x128xf32, #tpu.memory_space<vmem>>, vector<56x128xf32>
    %271 = vector.extract_strided_slice %270 {offsets = [0, 0], sizes = [32, 128], strides = [1, 1]} : vector<56x128xf32> to vector<32x128xf32>
    %272 = vector.extract_strided_slice %158 {offsets = [3, 0], sizes = [1, 128], strides = [1, 1]} : vector<31x128xf32> to vector<1x128xf32>
    %273 = vector.shape_cast %272 : vector<1x128xf32> to vector<128xf32>
    %274 = vector.shape_cast %273 : vector<128xf32> to vector<1x128xf32>
    %275 = vector.broadcast %274 : vector<1x128xf32> to vector<32x128xf32>
    %276 = arith.mulf %271, %275 : vector<32x128xf32>
    %277 = arith.addf %262, %276 : vector<32x128xf32>
    %278 = vector.extract_strided_slice %270 {offsets = [8, 0], sizes = [32, 128], strides = [1, 1]} : vector<56x128xf32> to vector<32x128xf32>
    %279 = vector.extract_strided_slice %158 {offsets = [11, 0], sizes = [1, 128], strides = [1, 1]} : vector<31x128xf32> to vector<1x128xf32>
    %280 = vector.shape_cast %279 : vector<1x128xf32> to vector<128xf32>
    %281 = vector.shape_cast %280 : vector<128xf32> to vector<1x128xf32>
    %282 = vector.broadcast %281 : vector<1x128xf32> to vector<32x128xf32>
    %283 = arith.mulf %278, %282 : vector<32x128xf32>
    %284 = arith.addf %269, %283 : vector<32x128xf32>
    %285 = vector.extract_strided_slice %270 {offsets = [16, 0], sizes = [32, 128], strides = [1, 1]} : vector<56x128xf32> to vector<32x128xf32>
    %286 = vector.extract_strided_slice %158 {offsets = [19, 0], sizes = [1, 128], strides = [1, 1]} : vector<31x128xf32> to vector<1x128xf32>
    %287 = vector.shape_cast %286 : vector<1x128xf32> to vector<128xf32>
    %288 = vector.shape_cast %287 : vector<128xf32> to vector<1x128xf32>
    %289 = vector.broadcast %288 : vector<1x128xf32> to vector<32x128xf32>
    %290 = arith.mulf %285, %289 : vector<32x128xf32>
    %291 = arith.addf %277, %290 : vector<32x128xf32>
    %292 = vector.extract_strided_slice %270 {offsets = [24, 0], sizes = [32, 128], strides = [1, 1]} : vector<56x128xf32> to vector<32x128xf32>
    %293 = vector.extract_strided_slice %158 {offsets = [27, 0], sizes = [1, 128], strides = [1, 1]} : vector<31x128xf32> to vector<1x128xf32>
    %294 = vector.shape_cast %293 : vector<1x128xf32> to vector<128xf32>
    %295 = vector.shape_cast %294 : vector<128xf32> to vector<1x128xf32>
    %296 = vector.broadcast %295 : vector<1x128xf32> to vector<32x128xf32>
    %297 = arith.mulf %292, %296 : vector<32x128xf32>
    %298 = arith.addf %284, %297 : vector<32x128xf32>
    %c5 = arith.constant 5 : index
    %c0_61 = arith.constant 0 : index
    %299 = vector.load %arg16[%c5, %c0_61] : memref<64x128xf32, #tpu.memory_space<vmem>>, vector<56x128xf32>
    %300 = vector.extract_strided_slice %299 {offsets = [0, 0], sizes = [32, 128], strides = [1, 1]} : vector<56x128xf32> to vector<32x128xf32>
    %301 = vector.extract_strided_slice %158 {offsets = [4, 0], sizes = [1, 128], strides = [1, 1]} : vector<31x128xf32> to vector<1x128xf32>
    %302 = vector.shape_cast %301 : vector<1x128xf32> to vector<128xf32>
    %303 = vector.shape_cast %302 : vector<128xf32> to vector<1x128xf32>
    %304 = vector.broadcast %303 : vector<1x128xf32> to vector<32x128xf32>
    %305 = arith.mulf %300, %304 : vector<32x128xf32>
    %306 = arith.addf %291, %305 : vector<32x128xf32>
    %307 = vector.extract_strided_slice %299 {offsets = [8, 0], sizes = [32, 128], strides = [1, 1]} : vector<56x128xf32> to vector<32x128xf32>
    %308 = vector.extract_strided_slice %158 {offsets = [12, 0], sizes = [1, 128], strides = [1, 1]} : vector<31x128xf32> to vector<1x128xf32>
    %309 = vector.shape_cast %308 : vector<1x128xf32> to vector<128xf32>
    %310 = vector.shape_cast %309 : vector<128xf32> to vector<1x128xf32>
    %311 = vector.broadcast %310 : vector<1x128xf32> to vector<32x128xf32>
    %312 = arith.mulf %307, %311 : vector<32x128xf32>
    %313 = arith.addf %298, %312 : vector<32x128xf32>
    %314 = vector.extract_strided_slice %299 {offsets = [16, 0], sizes = [32, 128], strides = [1, 1]} : vector<56x128xf32> to vector<32x128xf32>
    %315 = vector.extract_strided_slice %158 {offsets = [20, 0], sizes = [1, 128], strides = [1, 1]} : vector<31x128xf32> to vector<1x128xf32>
    %316 = vector.shape_cast %315 : vector<1x128xf32> to vector<128xf32>
    %317 = vector.shape_cast %316 : vector<128xf32> to vector<1x128xf32>
    %318 = vector.broadcast %317 : vector<1x128xf32> to vector<32x128xf32>
    %319 = arith.mulf %314, %318 : vector<32x128xf32>
    %320 = arith.addf %306, %319 : vector<32x128xf32>
    %321 = vector.extract_strided_slice %299 {offsets = [24, 0], sizes = [32, 128], strides = [1, 1]} : vector<56x128xf32> to vector<32x128xf32>
    %322 = vector.extract_strided_slice %158 {offsets = [28, 0], sizes = [1, 128], strides = [1, 1]} : vector<31x128xf32> to vector<1x128xf32>
    %323 = vector.shape_cast %322 : vector<1x128xf32> to vector<128xf32>
    %324 = vector.shape_cast %323 : vector<128xf32> to vector<1x128xf32>
    %325 = vector.broadcast %324 : vector<1x128xf32> to vector<32x128xf32>
    %326 = arith.mulf %321, %325 : vector<32x128xf32>
    %327 = arith.addf %313, %326 : vector<32x128xf32>
    %c6 = arith.constant 6 : index
    %c0_62 = arith.constant 0 : index
    %328 = vector.load %arg16[%c6, %c0_62] : memref<64x128xf32, #tpu.memory_space<vmem>>, vector<56x128xf32>
    %329 = vector.extract_strided_slice %328 {offsets = [0, 0], sizes = [32, 128], strides = [1, 1]} : vector<56x128xf32> to vector<32x128xf32>
    %330 = vector.extract_strided_slice %158 {offsets = [5, 0], sizes = [1, 128], strides = [1, 1]} : vector<31x128xf32> to vector<1x128xf32>
    %331 = vector.shape_cast %330 : vector<1x128xf32> to vector<128xf32>
    %332 = vector.shape_cast %331 : vector<128xf32> to vector<1x128xf32>
    %333 = vector.broadcast %332 : vector<1x128xf32> to vector<32x128xf32>
    %334 = arith.mulf %329, %333 : vector<32x128xf32>
    %335 = arith.addf %320, %334 : vector<32x128xf32>
    %336 = vector.extract_strided_slice %328 {offsets = [8, 0], sizes = [32, 128], strides = [1, 1]} : vector<56x128xf32> to vector<32x128xf32>
    %337 = vector.extract_strided_slice %158 {offsets = [13, 0], sizes = [1, 128], strides = [1, 1]} : vector<31x128xf32> to vector<1x128xf32>
    %338 = vector.shape_cast %337 : vector<1x128xf32> to vector<128xf32>
    %339 = vector.shape_cast %338 : vector<128xf32> to vector<1x128xf32>
    %340 = vector.broadcast %339 : vector<1x128xf32> to vector<32x128xf32>
    %341 = arith.mulf %336, %340 : vector<32x128xf32>
    %342 = arith.addf %327, %341 : vector<32x128xf32>
    %343 = vector.extract_strided_slice %328 {offsets = [16, 0], sizes = [32, 128], strides = [1, 1]} : vector<56x128xf32> to vector<32x128xf32>
    %344 = vector.extract_strided_slice %158 {offsets = [21, 0], sizes = [1, 128], strides = [1, 1]} : vector<31x128xf32> to vector<1x128xf32>
    %345 = vector.shape_cast %344 : vector<1x128xf32> to vector<128xf32>
    %346 = vector.shape_cast %345 : vector<128xf32> to vector<1x128xf32>
    %347 = vector.broadcast %346 : vector<1x128xf32> to vector<32x128xf32>
    %348 = arith.mulf %343, %347 : vector<32x128xf32>
    %349 = arith.addf %335, %348 : vector<32x128xf32>
    %350 = vector.extract_strided_slice %328 {offsets = [24, 0], sizes = [32, 128], strides = [1, 1]} : vector<56x128xf32> to vector<32x128xf32>
    %351 = vector.extract_strided_slice %158 {offsets = [29, 0], sizes = [1, 128], strides = [1, 1]} : vector<31x128xf32> to vector<1x128xf32>
    %352 = vector.shape_cast %351 : vector<1x128xf32> to vector<128xf32>
    %353 = vector.shape_cast %352 : vector<128xf32> to vector<1x128xf32>
    %354 = vector.broadcast %353 : vector<1x128xf32> to vector<32x128xf32>
    %355 = arith.mulf %350, %354 : vector<32x128xf32>
    %356 = arith.addf %342, %355 : vector<32x128xf32>
    %c7 = arith.constant 7 : index
    %c0_63 = arith.constant 0 : index
    %357 = vector.load %arg16[%c7, %c0_63] : memref<64x128xf32, #tpu.memory_space<vmem>>, vector<56x128xf32>
    %358 = vector.extract_strided_slice %357 {offsets = [0, 0], sizes = [32, 128], strides = [1, 1]} : vector<56x128xf32> to vector<32x128xf32>
    %359 = vector.extract_strided_slice %158 {offsets = [6, 0], sizes = [1, 128], strides = [1, 1]} : vector<31x128xf32> to vector<1x128xf32>
    %360 = vector.shape_cast %359 : vector<1x128xf32> to vector<128xf32>
    %361 = vector.shape_cast %360 : vector<128xf32> to vector<1x128xf32>
    %362 = vector.broadcast %361 : vector<1x128xf32> to vector<32x128xf32>
    %363 = arith.mulf %358, %362 : vector<32x128xf32>
    %364 = arith.addf %349, %363 : vector<32x128xf32>
    %365 = vector.extract_strided_slice %357 {offsets = [8, 0], sizes = [32, 128], strides = [1, 1]} : vector<56x128xf32> to vector<32x128xf32>
    %366 = vector.extract_strided_slice %158 {offsets = [14, 0], sizes = [1, 128], strides = [1, 1]} : vector<31x128xf32> to vector<1x128xf32>
    %367 = vector.shape_cast %366 : vector<1x128xf32> to vector<128xf32>
    %368 = vector.shape_cast %367 : vector<128xf32> to vector<1x128xf32>
    %369 = vector.broadcast %368 : vector<1x128xf32> to vector<32x128xf32>
    %370 = arith.mulf %365, %369 : vector<32x128xf32>
    %371 = arith.addf %356, %370 : vector<32x128xf32>
    %372 = vector.extract_strided_slice %357 {offsets = [16, 0], sizes = [32, 128], strides = [1, 1]} : vector<56x128xf32> to vector<32x128xf32>
    %373 = vector.extract_strided_slice %158 {offsets = [22, 0], sizes = [1, 128], strides = [1, 1]} : vector<31x128xf32> to vector<1x128xf32>
    %374 = vector.shape_cast %373 : vector<1x128xf32> to vector<128xf32>
    %375 = vector.shape_cast %374 : vector<128xf32> to vector<1x128xf32>
    %376 = vector.broadcast %375 : vector<1x128xf32> to vector<32x128xf32>
    %377 = arith.mulf %372, %376 : vector<32x128xf32>
    %378 = arith.addf %364, %377 : vector<32x128xf32>
    %379 = vector.extract_strided_slice %357 {offsets = [24, 0], sizes = [32, 128], strides = [1, 1]} : vector<56x128xf32> to vector<32x128xf32>
    %380 = vector.extract_strided_slice %158 {offsets = [30, 0], sizes = [1, 128], strides = [1, 1]} : vector<31x128xf32> to vector<1x128xf32>
    %381 = vector.shape_cast %380 : vector<1x128xf32> to vector<128xf32>
    %382 = vector.shape_cast %381 : vector<128xf32> to vector<1x128xf32>
    %383 = vector.broadcast %382 : vector<1x128xf32> to vector<32x128xf32>
    %384 = arith.mulf %379, %383 : vector<32x128xf32>
    %385 = arith.addf %371, %384 : vector<32x128xf32>
    %386 = arith.addf %385, %378 : vector<32x128xf32>
    %c0_64 = arith.constant 0 : index
    %c0_65 = arith.constant 0 : index
    %387 = vector.load %arg12[%c0_64, %c0_65] : memref<1x128xf32, #tpu.memory_space<vmem>>, vector<1x128xf32>
    %388 = vector.shape_cast %387 : vector<1x128xf32> to vector<128xf32>
    %389 = vector.shape_cast %388 : vector<128xf32> to vector<1x128xf32>
    %390 = vector.broadcast %389 : vector<1x128xf32> to vector<32x128xf32>
    %391 = arith.addf %386, %390 : vector<32x128xf32>
    %392 = arith.negf %391 : vector<32x128xf32>
    %393 = math.exp %392 : vector<32x128xf32>
    %cst_66 = arith.constant 1.000000e+00 : f32
    %394 = vector.broadcast %cst_66 : f32 to vector<32x128xf32>
    %395 = arith.addf %394, %393 : vector<32x128xf32>
    %396 = arith.divf %394, %395 : vector<32x128xf32>
    %397 = arith.mulf %391, %396 : vector<32x128xf32>
    %398 = arith.truncf %397 : vector<32x128xf32> to vector<32x128xbf16>
    %c0_67 = arith.constant 0 : index
    %c0_68 = arith.constant 0 : index
    %399 = vector.load %arg13[%c0_67, %c0_68] : memref<128x128xbf16, #tpu.memory_space<vmem>>, vector<128x128xbf16>
    %cst_69 = arith.constant dense<0.000000e+00> : vector<32x128xf32>
    %400 = tpu.matmul %398, %399, %cst_69 {dimension_numbers = #tpu.dot_dimension_numbers<[1], [0], [0], [1], [0, 0, 1, 1], [], []>} : vector<32x128xbf16>, vector<128x128xbf16>, vector<32x128xf32> -> vector<32x128xf32>
    %c0_70 = arith.constant 0 : index
    %c0_71 = arith.constant 0 : index
    %401 = vector.load %arg14[%c0_70, %c0_71] : memref<1x128xf32, #tpu.memory_space<vmem>>, vector<1x128xf32>
    %402 = vector.shape_cast %401 : vector<1x128xf32> to vector<128xf32>
    %403 = vector.shape_cast %402 : vector<128xf32> to vector<1x128xf32>
    %404 = vector.broadcast %403 : vector<1x128xf32> to vector<32x128xf32>
    %405 = arith.addf %400, %404 : vector<32x128xf32>
    %c0_72 = arith.constant 0 : index
    %c0_73 = arith.constant 0 : index
    %c0_74 = arith.constant 0 : index
    %406 = vector.load %arg15[%c0_72, %c0_73, %c0_74] : memref<1x32x128xf32, #tpu.memory_space<vmem>>, vector<1x32x128xf32>
    %407 = vector.shape_cast %406 : vector<1x32x128xf32> to vector<32x128xf32>
    %408 = vector.shape_cast %405 : vector<32x128xf32> to vector<1x32x128xf32>
    tpu.vector_store %arg15[%c0_72, %c0_73, %c0_74], %408 {strides = array<i32>} : memref<1x32x128xf32, #tpu.memory_space<vmem>>, vector<1x32x128xf32>,
    return
  }
  func.func @transform_0(%arg0: i32, %arg1: i32) -> (i32, i32, i32) {
    %c2_i32 = arith.constant 2 : i32
    %0 = arith.muli %arg1, %c2_i32 : i32
    %c1_i32 = arith.constant 1 : i32
    %1 = arith.subi %0, %c1_i32 : i32
    %c0_i32 = arith.constant 0 : i32
    %2 = arith.maxsi %1, %c0_i32 : i32
    %c0_i32_0 = arith.constant 0 : i32
    %c0_i32_1 = arith.constant 0 : i32
    return %arg0, %2, %c0_i32_0 : i32, i32, i32
  }
  func.func @transform_1(%arg0: i32, %arg1: i32) -> (i32, i32, i32) {
    %c0_i32 = arith.constant 0 : i32
    %c0_i32_0 = arith.constant 0 : i32
    return %arg0, %arg1, %c0_i32 : i32, i32, i32
  }
  func.func @transform_2(%arg0: i32, %arg1: i32) -> (i32, i32, i32) {
    %c2_i32 = arith.constant 2 : i32
    %0 = arith.muli %arg1, %c2_i32 : i32
    %c2_i32_0 = arith.constant 2 : i32
    %1 = arith.addi %0, %c2_i32_0 : i32
    %c3_i32 = arith.constant 3 : i32
    %2 = arith.minsi %1, %c3_i32 : i32
    %c0_i32 = arith.constant 0 : i32
    %c0_i32_1 = arith.constant 0 : i32
    return %arg0, %2, %c0_i32 : i32, i32, i32
  }
  func.func @transform_3(%arg0: i32, %arg1: i32) -> (i32, i32) {
    %c0_i32 = arith.constant 0 : i32
    %c0_i32_0 = arith.constant 0 : i32
    %c0_i32_1 = arith.constant 0 : i32
    return %c0_i32, %c0_i32_0 : i32, i32
  }
  func.func @transform_4(%arg0: i32, %arg1: i32) -> (i32, i32) {
    %c0_i32 = arith.constant 0 : i32
    %c0_i32_0 = arith.constant 0 : i32
    %c0_i32_1 = arith.constant 0 : i32
    return %c0_i32, %c0_i32_0 : i32, i32
  }
  func.func @transform_5(%arg0: i32, %arg1: i32) -> (i32, i32) {
    %c0_i32 = arith.constant 0 : i32
    %c0_i32_0 = arith.constant 0 : i32
    %c0_i32_1 = arith.constant 0 : i32
    return %c0_i32, %c0_i32_0 : i32, i32
  }
  func.func @transform_6(%arg0: i32, %arg1: i32) -> (i32, i32) {
    %c0_i32 = arith.constant 0 : i32
    %c0_i32_0 = arith.constant 0 : i32
    %c0_i32_1 = arith.constant 0 : i32
    return %c0_i32, %c0_i32_0 : i32, i32
  }
  func.func @transform_7(%arg0: i32, %arg1: i32) -> (i32, i32) {
    %c0_i32 = arith.constant 0 : i32
    %c0_i32_0 = arith.constant 0 : i32
    %c0_i32_1 = arith.constant 0 : i32
    return %c0_i32, %c0_i32_0 : i32, i32
  }
  func.func @transform_8(%arg0: i32, %arg1: i32) -> (i32, i32) {
    %c0_i32 = arith.constant 0 : i32
    %c0_i32_0 = arith.constant 0 : i32
    %c0_i32_1 = arith.constant 0 : i32
    return %c0_i32, %c0_i32_0 : i32, i32
  }
  func.func @transform_9(%arg0: i32, %arg1: i32) -> (i32, i32) {
    %c0_i32 = arith.constant 0 : i32
    %c0_i32_0 = arith.constant 0 : i32
    %c0_i32_1 = arith.constant 0 : i32
    return %c0_i32, %c0_i32_0 : i32, i32
  }
  func.func @transform_10(%arg0: i32, %arg1: i32) -> (i32, i32) {
    %c0_i32 = arith.constant 0 : i32
    %c0_i32_0 = arith.constant 0 : i32
    %c0_i32_1 = arith.constant 0 : i32
    return %c0_i32, %c0_i32_0 : i32, i32
  }
  func.func @transform_11(%arg0: i32, %arg1: i32) -> (i32, i32) {
    %c0_i32 = arith.constant 0 : i32
    %c0_i32_0 = arith.constant 0 : i32
    %c0_i32_1 = arith.constant 0 : i32
    return %c0_i32, %c0_i32_0 : i32, i32
  }
  func.func @transform_12(%arg0: i32, %arg1: i32) -> (i32, i32) {
    %c0_i32 = arith.constant 0 : i32
    %c0_i32_0 = arith.constant 0 : i32
    %c0_i32_1 = arith.constant 0 : i32
    return %c0_i32, %c0_i32_0 : i32, i32
  }
  func.func @transform_13(%arg0: i32, %arg1: i32) -> (i32, i32, i32) {
    %c0_i32 = arith.constant 0 : i32
    %c0_i32_0 = arith.constant 0 : i32
    return %arg0, %arg1, %c0_i32 : i32, i32, i32
  }
}

</mosaic_0001>

<llo_original>
// kernel: tpu_custom_call.1
$region0: #{tpu_custom_call.1}
  #allocation0 [shape = 'u32[]', space=smem, size = 0x4, offset = 0x4, fixed_abs, tag = 'smem constant byte address 0x4 - core index']
  #allocation1 [shape = 'u32[144,128]{1,0:T(1,128)}', space=vmem, size = 0x12000, scoped, tag = 'internal scratch']
  #allocation2 [shape = 'f32[64,128]{1,0:T(8,128)}', space=vmem, size = 0x8000, scoped, tag = 'scratch operand']
  %s0 = inlined_call_operand.hbm [shape: f32[2,64,128], index: 0, kind: input, shape index: {}]
  %s1 = inlined_call_operand.hbm [shape: f32[2,64,128], index: 1, kind: input, shape index: {}]
  %s2 = inlined_call_operand.hbm [shape: f32[2,64,128], index: 2, kind: input, shape index: {}]
  %s3 = inlined_call_operand.vmem [shape: f32[1,128], index: 3, kind: input, shape index: {}]
  %s4 = inlined_call_operand.vmem [shape: f32[1,128], index: 4, kind: input, shape index: {}]
  %s5 = inlined_call_operand.hbm [shape: bf16[128,128], index: 5, kind: input, shape index: {}]
  %s6 = inlined_call_operand.vmem [shape: f32[1,128], index: 6, kind: input, shape index: {}]
  %s7 = inlined_call_operand.hbm [shape: bf16[128,128], index: 7, kind: input, shape index: {}]
  %s8 = inlined_call_operand.vmem [shape: f32[1,128], index: 8, kind: input, shape index: {}]
  %s9 = inlined_call_operand.hbm [shape: f32[31,128], index: 9, kind: input, shape index: {}]
  %s10 = inlined_call_operand.vmem [shape: f32[1,128], index: 10, kind: input, shape index: {}]
  %s11 = inlined_call_operand.hbm [shape: bf16[128,128], index: 11, kind: input, shape index: {}]
  %s12 = inlined_call_operand.vmem [shape: f32[1,128], index: 12, kind: input, shape index: {}]
  %s13 = inlined_call_operand.hbm [shape: f32[2,64,128], index: 13, kind: output, shape index: {}]
  %s14 = sld [smem:[#allocation0]]
  $region113: #{tpu_custom_call.1} parent=0
    _
  %s16 = ssub.s32 1, %s14
  %s17 = scalar_select 0, %s16, %s14
  $region1: #{tpu_custom_call.1} parent=0
    #allocation3 [shape = 'u8[16384]{0}', space=vmem, size = 0x4000, scoped, tag = 'input window, operand 0']
    #allocation4 [shape = 's32[2]{0}', space=sflag, size = 0x8, scoped, tag = 'scoped memory for tpu_custom_call.1']
    #allocation5 [shape = 's32[2]{0}', space=sflag, size = 0x8, scoped, tag = 'scoped memory for tpu_custom_call.1']
    #allocation6 [shape = 'u8[32768]{0}', space=vmem, size = 0x8000, scoped, tag = 'input window, operand 1']
    #allocation7 [shape = 's32[2]{0}', space=sflag, size = 0x8, scoped, tag = 'scoped memory for tpu_custom_call.1']
    #allocation8 [shape = 'u8[16384]{0}', space=vmem, size = 0x4000, scoped, tag = 'input window, operand 2']
    #allocation9 [shape = 'u8[32768]{0}', space=vmem, size = 0x8000, scoped, tag = 'input window, operand 5, single buffered']
    #allocation10 [shape = 's32[1]{0}', space=sflag, size = 0x4, scoped, tag = 'scoped memory for tpu_custom_call.1']
    #allocation11 [shape = 'u8[32768]{0}', space=vmem, size = 0x8000, scoped, tag = 'input window, operand 7, single buffered']
    #allocation12 [shape = 'u8[16384]{0}', space=vmem, size = 0x4000, scoped, tag = 'input window, operand 9, single buffered']
    #allocation13 [shape = 's32[1]{0}', space=sflag, size = 0x4, scoped, tag = 'scoped memory for tpu_custom_call.1']
    #allocation14 [shape = 'u8[32768]{0}', space=vmem, size = 0x8000, scoped, tag = 'input window, operand 11, single buffered']
    #allocation15 [shape = 'u8[32768]{0}', space=vmem, size = 0x8000, scoped, tag = 'output window, operand 0']
    %18 = vsyncpa [#allocation4], 0
    %s19 = scalar_lea.sflag [#allocation4], 1
    %20 = vsyncpa %s19, 0
    %21 = vsyncpa [#allocation7], 0
    %s22 = scalar_lea.sflag [#allocation7], 1
    %23 = vsyncpa %s22, 0
    %24 = vsyncpa [#allocation10], 0
    %25 = vsyncpa [#allocation13], 0
    %26 = vsyncpa [#allocation5], 0
    %s27 = scalar_lea.sflag [#allocation5], 1
    %28 = vsyncpa %s27, 0
    loop: start=0, step=1, limit=6
    $region2: #{tpu_custom_call.1} parent=1 // loop_pre_header
      _
    $region3: #{tpu_custom_call.1} parent=1 // loop_header
      %s30 = sphi 0, %s34
      %p31 = scmp.ge.s32.totalorder %s30, 6
      %s37 = sphi 0, %s49
      %s38 = sphi 0, %s45
      %s39 = sphi 0, %s37
      %s40 = sphi 0, %s38
      %s41 = sphi 0, %s39
      %s42 = sphi 0, %s40
      %s62 = sphi 0, %s64
      %s65 = sphi 0, %s62
      %s66 = sphi 0, %s65
      %s82 = sphi 0, %s66
      %s90 = sphi 0, %s92
      %s93 = sphi 0, %s90
      %s94 = sphi 0, %s93
      %s110 = sphi 0, %s94
      %s126 = sphi 0, %s128
      %s129 = sphi 0, %s126
      %s130 = sphi 0, %s129
      %s146 = sphi 0, %s130
      %s150 = sphi 0, %s150
      %s152 = sphi 0, %s150
      %s153 = sphi 0, %s152
      %s167 = sphi 0, %s153
      %s171 = sphi 0, %s171
      %s173 = sphi 0, %s171
      %s174 = sphi 0, %s173
      %s188 = sphi 0, %s174
      %s192 = sphi 0, %s192
      %s194 = sphi 0, %s192
      %s195 = sphi 0, %s194
      %s209 = sphi 0, %s195
      %s213 = sphi 0, %s213
      %s215 = sphi 0, %s213
      %s216 = sphi 0, %s215
      %s230 = sphi 0, %s216
      %s234 = sphi 0, %s234
      %s236 = sphi 0, %s234
      %s237 = sphi 0, %s236
      %s251 = sphi 0, %s237
      %s255 = sphi 0, %s255
      %s257 = sphi 0, %s255
      %s258 = sphi 0, %s257
      %s272 = sphi 0, %s258
      %s276 = sphi 0, %s276
      %s278 = sphi 0, %s276
      %s279 = sphi 0, %s278
      %s293 = sphi 0, %s279
      %s297 = sphi 0, %s297
      %s299 = sphi 0, %s297
      %s300 = sphi 0, %s299
      %s314 = sphi 0, %s300
      %s318 = sphi 0, %s318
      %s320 = sphi 0, %s318
      %s321 = sphi 0, %s320
      %s335 = sphi 0, %s321
      %s339 = sphi 0, %s339
      %s341 = sphi 0, %s339
      %s342 = sphi 0, %s341
      %s356 = sphi 0, %s342
      %s364 = sphi 0, %s366
      %s367 = sphi 0, %s364
      %s368 = sphi 0, %s367
      %s384 = sphi 0, %s368
    $region4: #{tpu_custom_call.1} parent=1 // loop_header_branch
      %33 = sbr.rel (%p31) target = $region8
    $region5: #{tpu_custom_call.1} parent=1 // loop_body
      %s35 = ssub.s32 %s30, 1
      %s36 = ssub.s32 %s30, 2
      %s43 = sadd.s32 1, %s38
      %p44 = scmp.ge.s32.totalorder %s43, 2
      %s45 = scalar_select %p44, 0, %s43
      %s46 = sadd.s32 1, %s37
      %s47 = scalar_select %p44, %s46, %s37
      %p48 = scmp.ge.s32.totalorder %s47, 2
      %s49 = scalar_select %p48, 0, %s47
      %s50 = smul.u32 %s38, 2
      %s51 = ssub.s32 %s50, 1
      %p52 = scmp.gt.s32.totalorder %s51, 0
      %s53 = scalar_select %p52, %s51, 0
      %s54 = smul.u32 %s45, 2
      %s55 = ssub.s32 %s54, 1
      %p56 = scmp.gt.s32.totalorder %s55, 0
      %s57 = scalar_select %p56, %s55, 0
      %s58 = ssub.s32 %s37, %s49
      %s59 = ssub.s32 %s53, %s57
      %s60 = sor.u32 %s58, %s59
      %p61 = scmp.eq.s32.totalorder %s60, 0
      %s63 = sadd.s32 %s62, 1
      %s64 = scalar_select %p61, %s62, %s63
      %p67 = pneg %p61
      %p68 = scmp.eq.s32.totalorder %s30, 3
      %p69 = por %p67, %p68
      %p70 = scmp.ne.s32.totalorder %s62, %s65
      %p71 = scmp.eq.s32.totalorder %s30, 0
      %p72 = por %p70, %p71
      %p73 = scmp.ne.s32.totalorder %s62, %s65
      %p74 = scmp.eq.s32.totalorder %s35, 3
      %p75 = por %p73, %p74
      %p76 = scmp.ne.s32.totalorder %s65, %s66
      %p77 = scmp.eq.s32.totalorder %s35, 0
      %p78 = por %p76, %p77
      %p79 = scmp.ne.s32.totalorder %s65, %s66
      %p80 = scmp.eq.s32.totalorder %s36, 3
      %p81 = por %p79, %p80
      %p83 = scmp.ne.s32.totalorder %s66, %s82
      %p84 = scmp.eq.s32.totalorder %s36, 0
      %p85 = por %p83, %p84
      %s86 = ssub.s32 %s37, %s49
      %s87 = ssub.s32 %s38, %s45
      %s88 = sor.u32 %s86, %s87
      %p89 = scmp.eq.s32.totalorder %s88, 0
      %s91 = sadd.s32 %s90, 1
      %s92 = scalar_select %p89, %s90, %s91
      %p95 = pneg %p89
      %p96 = scmp.eq.s32.totalorder %s30, 3
      %p97 = por %p95, %p96
      %p98 = scmp.ne.s32.totalorder %s90, %s93
      %p99 = scmp.eq.s32.totalorder %s30, 0
      %p100 = por %p98, %p99
      %p101 = scmp.ne.s32.totalorder %s90, %s93
      %p102 = scmp.eq.s32.totalorder %s35, 3
      %p103 = por %p101, %p102
      %p104 = scmp.ne.s32.totalorder %s93, %s94
      %p105 = scmp.eq.s32.totalorder %s35, 0
      %p106 = por %p104, %p105
      %p107 = scmp.ne.s32.totalorder %s93, %s94
      %p108 = scmp.eq.s32.totalorder %s36, 3
      %p109 = por %p107, %p108
      %p111 = scmp.ne.s32.totalorder %s94, %s110
      %p112 = scmp.eq.s32.totalorder %s36, 0
      %p113 = por %p111, %p112
      %s114 = smul.u32 %s38, 2
      %s115 = sadd.s32 %s114, 2
      %p116 = scmp.lt.s32.totalorder %s115, 3
      %s117 = scalar_select %p116, %s115, 3
      %s118 = smul.u32 %s45, 2
      %s119 = sadd.s32 %s118, 2
      %p120 = scmp.lt.s32.totalorder %s119, 3
      %s121 = scalar_select %p120, %s119, 3
      %s122 = ssub.s32 %s37, %s49
      %s123 = ssub.s32 %s117, %s121
      %s124 = sor.u32 %s122, %s123
      %p125 = scmp.eq.s32.totalorder %s124, 0
      %s127 = sadd.s32 %s126, 1
      %s128 = scalar_select %p125, %s126, %s127
      %p131 = pneg %p125
      %p132 = scmp.eq.s32.totalorder %s30, 3
      %p133 = por %p131, %p132
      %p134 = scmp.ne.s32.totalorder %s126, %s129
      %p135 = scmp.eq.s32.totalorder %s30, 0
      %p136 = por %p134, %p135
      %p137 = scmp.ne.s32.totalorder %s126, %s129
      %p138 = scmp.eq.s32.totalorder %s35, 3
      %p139 = por %p137, %p138
      %p140 = scmp.ne.s32.totalorder %s129, %s130
      %p141 = scmp.eq.s32.totalorder %s35, 0
      %p142 = por %p140, %p141
      %p143 = scmp.ne.s32.totalorder %s129, %s130
      %p144 = scmp.eq.s32.totalorder %s36, 3
      %p145 = por %p143, %p144
      %p147 = scmp.ne.s32.totalorder %s130, %s146
      %p148 = scmp.eq.s32.totalorder %s36, 0
      %p149 = por %p147, %p148
      %s151 = sadd.s32 %s150, 1
      %p154 = scmp.eq.s32.totalorder %s30, 3
      %p155 = scmp.ne.s32.totalorder %s150, %s152
      %p156 = scmp.eq.s32.totalorder %s30, 0
      %p157 = por %p155, %p156
      %p158 = scmp.ne.s32.totalorder %s150, %s152
      %p159 = scmp.eq.s32.totalorder %s35, 3
      %p160 = por %p158, %p159
      %p161 = scmp.ne.s32.totalorder %s152, %s153
      %p162 = scmp.eq.s32.totalorder %s35, 0
      %p163 = por %p161, %p162
      %p164 = scmp.ne.s32.totalorder %s152, %s153
      %p165 = scmp.eq.s32.totalorder %s36, 3
      %p166 = por %p164, %p165
      %p168 = scmp.ne.s32.totalorder %s153, %s167
      %p169 = scmp.eq.s32.totalorder %s36, 0
      %p170 = por %p168, %p169
      %s172 = sadd.s32 %s171, 1
      %p175 = scmp.eq.s32.totalorder %s30, 3
      %p176 = scmp.ne.s32.totalorder %s171, %s173
      %p177 = scmp.eq.s32.totalorder %s30, 0
      %p178 = por %p176, %p177
      %p179 = scmp.ne.s32.totalorder %s171, %s173
      %p180 = scmp.eq.s32.totalorder %s35, 3
      %p181 = por %p179, %p180
      %p182 = scmp.ne.s32.totalorder %s173, %s174
      %p183 = scmp.eq.s32.totalorder %s35, 0
      %p184 = por %p182, %p183
      %p185 = scmp.ne.s32.totalorder %s173, %s174
      %p186 = scmp.eq.s32.totalorder %s36, 3
      %p187 = por %p185, %p186
      %p189 = scmp.ne.s32.totalorder %s174, %s188
      %p190 = scmp.eq.s32.totalorder %s36, 0
      %p191 = por %p189, %p190
      %s193 = sadd.s32 %s192, 1
      %p196 = scmp.eq.s32.totalorder %s30, 3
      %p197 = scmp.ne.s32.totalorder %s192, %s194
      %p198 = scmp.eq.s32.totalorder %s30, 0
      %p199 = por %p197, %p198
      %p200 = scmp.ne.s32.totalorder %s192, %s194
      %p201 = scmp.eq.s32.totalorder %s35, 3
      %p202 = por %p200, %p201
      %p203 = scmp.ne.s32.totalorder %s194, %s195
      %p204 = scmp.eq.s32.totalorder %s35, 0
      %p205 = por %p203, %p204
      %p206 = scmp.ne.s32.totalorder %s194, %s195
      %p207 = scmp.eq.s32.totalorder %s36, 3
      %p208 = por %p206, %p207
      %p210 = scmp.ne.s32.totalorder %s195, %s209
      %p211 = scmp.eq.s32.totalorder %s36, 0
      %p212 = por %p210, %p211
      %s214 = sadd.s32 %s213, 1
      %p217 = scmp.eq.s32.totalorder %s30, 3
      %p218 = scmp.ne.s32.totalorder %s213, %s215
      %p219 = scmp.eq.s32.totalorder %s30, 0
      %p220 = por %p218, %p219
      %p221 = scmp.ne.s32.totalorder %s213, %s215
      %p222 = scmp.eq.s32.totalorder %s35, 3
      %p223 = por %p221, %p222
      %p224 = scmp.ne.s32.totalorder %s215, %s216
      %p225 = scmp.eq.s32.totalorder %s35, 0
      %p226 = por %p224, %p225
      %p227 = scmp.ne.s32.totalorder %s215, %s216
      %p228 = scmp.eq.s32.totalorder %s36, 3
      %p229 = por %p227, %p228
      %p231 = scmp.ne.s32.totalorder %s216, %s230
      %p232 = scmp.eq.s32.totalorder %s36, 0
      %p233 = por %p231, %p232
      %s235 = sadd.s32 %s234, 1
      %p238 = scmp.eq.s32.totalorder %s30, 3
      %p239 = scmp.ne.s32.totalorder %s234, %s236
      %p240 = scmp.eq.s32.totalorder %s30, 0
      %p241 = por %p239, %p240
      %p242 = scmp.ne.s32.totalorder %s234, %s236
      %p243 = scmp.eq.s32.totalorder %s35, 3
      %p244 = por %p242, %p243
      %p245 = scmp.ne.s32.totalorder %s236, %s237
      %p246 = scmp.eq.s32.totalorder %s35, 0
      %p247 = por %p245, %p246
      %p248 = scmp.ne.s32.totalorder %s236, %s237
      %p249 = scmp.eq.s32.totalorder %s36, 3
      %p250 = por %p248, %p249
      %p252 = scmp.ne.s32.totalorder %s237, %s251
      %p253 = scmp.eq.s32.totalorder %s36, 0
      %p254 = por %p252, %p253
      %s256 = sadd.s32 %s255, 1
      %p259 = scmp.eq.s32.totalorder %s30, 3
      %p260 = scmp.ne.s32.totalorder %s255, %s257
      %p261 = scmp.eq.s32.totalorder %s30, 0
      %p262 = por %p260, %p261
      %p263 = scmp.ne.s32.totalorder %s255, %s257
      %p264 = scmp.eq.s32.totalorder %s35, 3
      %p265 = por %p263, %p264
      %p266 = scmp.ne.s32.totalorder %s257, %s258
      %p267 = scmp.eq.s32.totalorder %s35, 0
      %p268 = por %p266, %p267
      %p269 = scmp.ne.s32.totalorder %s257, %s258
      %p270 = scmp.eq.s32.totalorder %s36, 3
      %p271 = por %p269, %p270
      %p273 = scmp.ne.s32.totalorder %s258, %s272
      %p274 = scmp.eq.s32.totalorder %s36, 0
      %p275 = por %p273, %p274
      %s277 = sadd.s32 %s276, 1
      %p280 = scmp.eq.s32.totalorder %s30, 3
      %p281 = scmp.ne.s32.totalorder %s276, %s278
      %p282 = scmp.eq.s32.totalorder %s30, 0
      %p283 = por %p281, %p282
      %p284 = scmp.ne.s32.totalorder %s276, %s278
      %p285 = scmp.eq.s32.totalorder %s35, 3
      %p286 = por %p284, %p285
      %p287 = scmp.ne.s32.totalorder %s278, %s279
      %p288 = scmp.eq.s32.totalorder %s35, 0
      %p289 = por %p287, %p288
      %p290 = scmp.ne.s32.totalorder %s278, %s279
      %p291 = scmp.eq.s32.totalorder %s36, 3
      %p292 = por %p290, %p291
      %p294 = scmp.ne.s32.totalorder %s279, %s293
      %p295 = scmp.eq.s32.totalorder %s36, 0
      %p296 = por %p294, %p295
      %s298 = sadd.s32 %s297, 1
      %p301 = scmp.eq.s32.totalorder %s30, 3
      %p302 = scmp.ne.s32.totalorder %s297, %s299
      %p303 = scmp.eq.s32.totalorder %s30, 0
      %p304 = por %p302, %p303
      %p305 = scmp.ne.s32.totalorder %s297, %s299
      %p306 = scmp.eq.s32.totalorder %s35, 3
      %p307 = por %p305, %p306
      %p308 = scmp.ne.s32.totalorder %s299, %s300
      %p309 = scmp.eq.s32.totalorder %s35, 0
      %p310 = por %p308, %p309
      %p311 = scmp.ne.s32.totalorder %s299, %s300
      %p312 = scmp.eq.s32.totalorder %s36, 3
      %p313 = por %p311, %p312
      %p315 = scmp.ne.s32.totalorder %s300, %s314
      %p316 = scmp.eq.s32.totalorder %s36, 0
      %p317 = por %p315, %p316
      %s319 = sadd.s32 %s318, 1
      %p322 = scmp.eq.s32.totalorder %s30, 3
      %p323 = scmp.ne.s32.totalorder %s318, %s320
      %p324 = scmp.eq.s32.totalorder %s30, 0
      %p325 = por %p323, %p324
      %p326 = scmp.ne.s32.totalorder %s318, %s320
      %p327 = scmp.eq.s32.totalorder %s35, 3
      %p328 = por %p326, %p327
      %p329 = scmp.ne.s32.totalorder %s320, %s321
      %p330 = scmp.eq.s32.totalorder %s35, 0
      %p331 = por %p329, %p330
      %p332 = scmp.ne.s32.totalorder %s320, %s321
      %p333 = scmp.eq.s32.totalorder %s36, 3
      %p334 = por %p332, %p333
      %p336 = scmp.ne.s32.totalorder %s321, %s335
      %p337 = scmp.eq.s32.totalorder %s36, 0
      %p338 = por %p336, %p337
      %s340 = sadd.s32 %s339, 1
      %p343 = scmp.eq.s32.totalorder %s30, 3
      %p344 = scmp.ne.s32.totalorder %s339, %s341
      %p345 = scmp.eq.s32.totalorder %s30, 0
      %p346 = por %p344, %p345
      %p347 = scmp.ne.s32.totalorder %s339, %s341
      %p348 = scmp.eq.s32.totalorder %s35, 3
      %p349 = por %p347, %p348
      %p350 = scmp.ne.s32.totalorder %s341, %s342
      %p351 = scmp.eq.s32.totalorder %s35, 0
      %p352 = por %p350, %p351
      %p353 = scmp.ne.s32.totalorder %s341, %s342
      %p354 = scmp.eq.s32.totalorder %s36, 3
      %p355 = por %p353, %p354
      %p357 = scmp.ne.s32.totalorder %s342, %s356
      %p358 = scmp.eq.s32.totalorder %s36, 0
      %p359 = por %p357, %p358
      %s360 = ssub.s32 %s37, %s49
      %s361 = ssub.s32 %s38, %s45
      %s362 = sor.u32 %s360, %s361
      %p363 = scmp.eq.s32.totalorder %s362, 0
      %s365 = sadd.s32 %s364, 1
      %s366 = scalar_select %p363, %s364, %s365
      %p369 = pneg %p363
      %p370 = scmp.eq.s32.totalorder %s30, 3
      %p371 = por %p369, %p370
      %p372 = scmp.ne.s32.totalorder %s364, %s367
      %p373 = scmp.eq.s32.totalorder %s30, 0
      %p374 = por %p372, %p373
      %p375 = scmp.ne.s32.totalorder %s364, %s367
      %p376 = scmp.eq.s32.totalorder %s35, 3
      %p377 = por %p375, %p376
      %p378 = scmp.ne.s32.totalorder %s367, %s368
      %p379 = scmp.eq.s32.totalorder %s35, 0
      %p380 = por %p378, %p379
      %p381 = scmp.ne.s32.totalorder %s367, %s368
      %p382 = scmp.eq.s32.totalorder %s36, 3
      %p383 = por %p381, %p382
      %p385 = scmp.ne.s32.totalorder %s368, %s384
      %p386 = scmp.eq.s32.totalorder %s36, 0
      %p387 = por %p385, %p386
      %p388 = scmp.le.s32.totalorder 1, %s30
      %p389 = scmp.lt.s32.totalorder %s30, 5
      %p390 = pnand %p388, %p389
      %p391 = pneg %p390
      // Predicated region
      $region9: #{tpu_custom_call.1} parent=5 // pred_check
        _
      $region10: #{tpu_custom_call.1} parent=5 // pred_check_branch
        %393 = sbr.rel (%p390) target = $region12
      $region11: #{tpu_custom_call.1} parent=5 // pred_region
        %s394 = ssub.s32 %s30, 1
        // Predicated region
        $region13: #{tpu_custom_call.1} parent=11 // pred_check
          %p395 = pneg %p163
        $region14: #{tpu_custom_call.1} parent=11 // pred_check_branch
          %397 = sbr.rel (%p395) target = $region16
        $region15: #{tpu_custom_call.1} parent=11 // pred_region
          _
        $region16: #{tpu_custom_call.1} parent=11 // pred_fallthru
          _
        // Predicated region
        $region17: #{tpu_custom_call.1} parent=11 // pred_check
          %p398 = pneg %p184
        $region18: #{tpu_custom_call.1} parent=11 // pred_check_branch
          %400 = sbr.rel (%p398) target = $region20
        $region19: #{tpu_custom_call.1} parent=11 // pred_region
          _
        $region20: #{tpu_custom_call.1} parent=11 // pred_fallthru
          _
        // Predicated region
        $region21: #{tpu_custom_call.1} parent=11 // pred_check
          %p401 = pneg %p205
        $region22: #{tpu_custom_call.1} parent=11 // pred_check_branch
          %403 = sbr.rel (%p401) target = $region24
        $region23: #{tpu_custom_call.1} parent=11 // pred_region
          %s405 = ssub.s32 1024, 1024
          %406 = vsyncadd [#allocation10], %s405
          %s407 = sshll.u32 [#allocation9], 4
          %s408 = int_to_ptr.vmem [resolvable:$true] %s407
          %413 = dma.hbm_to_vmem [thread:$0]  %s5, 1024, %s408, [#allocation10], 64, 64, 4
        $region24: #{tpu_custom_call.1} parent=11 // pred_fallthru
          _
        // Predicated region
        $region25: #{tpu_custom_call.1} parent=11 // pred_check
          %p414 = pneg %p226
        $region26: #{tpu_custom_call.1} parent=11 // pred_check_branch
          %416 = sbr.rel (%p414) target = $region28
        $region27: #{tpu_custom_call.1} parent=11 // pred_region
          _
        $region28: #{tpu_custom_call.1} parent=11 // pred_fallthru
          _
        // Predicated region
        $region29: #{tpu_custom_call.1} parent=11 // pred_check
          %p417 = pneg %p247
        $region30: #{tpu_custom_call.1} parent=11 // pred_check_branch
          %419 = sbr.rel (%p417) target = $region32
        $region31: #{tpu_custom_call.1} parent=11 // pred_region
          %s421 = ssub.s32 1024, 1024
          %422 = vsyncadd [#allocation10], %s421
          %s423 = sshll.u32 [#allocation11], 4
          %s424 = int_to_ptr.vmem [resolvable:$true] %s423
          %429 = dma.hbm_to_vmem [thread:$0]  %s7, 1024, %s424, [#allocation10], 64, 64, 4
        $region32: #{tpu_custom_call.1} parent=11 // pred_fallthru
          _
        // Predicated region
        $region33: #{tpu_custom_call.1} parent=11 // pred_check
          %p430 = pneg %p268
        $region34: #{tpu_custom_call.1} parent=11 // pred_check_branch
          %432 = sbr.rel (%p430) target = $region36
        $region35: #{tpu_custom_call.1} parent=11 // pred_region
          _
        $region36: #{tpu_custom_call.1} parent=11 // pred_fallthru
          _
        // Predicated region
        $region37: #{tpu_custom_call.1} parent=11 // pred_check
          %p433 = pneg %p289
        $region38: #{tpu_custom_call.1} parent=11 // pred_check_branch
          %435 = sbr.rel (%p433) target = $region40
        $region39: #{tpu_custom_call.1} parent=11 // pred_region
          %s437 = ssub.s32 512, 512
          %438 = vsyncadd [#allocation13], %s437
          %s439 = sshll.u32 [#allocation12], 4
          %s440 = int_to_ptr.vmem [resolvable:$true] %s439
          %445 = dma.hbm_to_vmem [thread:$0]  %s9, 512, %s440, [#allocation13], 128, 128, 8
        $region40: #{tpu_custom_call.1} parent=11 // pred_fallthru
          _
        // Predicated region
        $region41: #{tpu_custom_call.1} parent=11 // pred_check
          %p446 = pneg %p310
        $region42: #{tpu_custom_call.1} parent=11 // pred_check_branch
          %448 = sbr.rel (%p446) target = $region44
        $region43: #{tpu_custom_call.1} parent=11 // pred_region
          _
        $region44: #{tpu_custom_call.1} parent=11 // pred_fallthru
          _
        // Predicated region
        $region45: #{tpu_custom_call.1} parent=11 // pred_check
          %p449 = pneg %p331
        $region46: #{tpu_custom_call.1} parent=11 // pred_check_branch
          %451 = sbr.rel (%p449) target = $region48
        $region47: #{tpu_custom_call.1} parent=11 // pred_region
          %s453 = ssub.s32 1024, 1024
          %454 = vsyncadd [#allocation13], %s453
          %s455 = sshll.u32 [#allocation14], 4
          %s456 = int_to_ptr.vmem [resolvable:$true] %s455
          %461 = dma.hbm_to_vmem [thread:$0]  %s11, 1024, %s456, [#allocation13], 64, 64, 4
        $region48: #{tpu_custom_call.1} parent=11 // pred_fallthru
          _
        // Predicated region
        $region49: #{tpu_custom_call.1} parent=11 // pred_check
          %p462 = pneg %p352
        $region50: #{tpu_custom_call.1} parent=11 // pred_check_branch
          %464 = sbr.rel (%p462) target = $region52
        $region51: #{tpu_custom_call.1} parent=11 // pred_region
          _
        $region52: #{tpu_custom_call.1} parent=11 // pred_fallthru
          _
      $region12: #{tpu_custom_call.1} parent=5 // pred_fallthru
        _
      %p465 = scmp.lt.s32.totalorder %s30, 4
      // Predicated region
      $region53: #{tpu_custom_call.1} parent=5 // pred_check
        %p466 = pneg %p465
      $region54: #{tpu_custom_call.1} parent=5 // pred_check_branch
        %468 = sbr.rel (%p466) target = $region56
      $region55: #{tpu_custom_call.1} parent=5 // pred_region
        // Predicated region
        $region57: #{tpu_custom_call.1} parent=55 // pred_check
          %p469 = pneg %p72
        $region58: #{tpu_custom_call.1} parent=55 // pred_check_branch
          %471 = sbr.rel (%p469) target = $region60
        $region59: #{tpu_custom_call.1} parent=55 // pred_region
          %s472 = sand.u32 %s62, 1
          %s473 = scalar_lea.sflag [#allocation4], %s472
          %s474 = sand.u32 %s62, 1
          %s475 = smul.addr %s474, 16
          %s476 = scalar_lea.vmem [#allocation3], %s475
          %s477 = smul.u32 %s38, 2
          %s478 = ssub.s32 %s477, 1
          %p479 = scmp.gt.s32.totalorder %s478, 0
          %s480 = scalar_select %p479, %s478, 0
          %s481 = smul.u32 2, %s480
          %s483 = ssub.s32 256, 256
          %484 = vsyncadd %s473, %s483
          %s485 = smul.addr %s37, 8
          %s486 = sadd.s32 %s481, %s485
          %s487 = smul.addr %s486, 128
          %s488 = scalar_lea.hbm %s0, %s487
          %s489 = sshll.u32 %s476, 4
          %s490 = int_to_ptr.vmem [resolvable:$true] %s489
          %495 = dma.hbm_to_vmem [thread:$0]  %s488, 256, %s490, %s473, 128, 128, 8
        $region60: #{tpu_custom_call.1} parent=55 // pred_fallthru
          _
        // Predicated region
        $region61: #{tpu_custom_call.1} parent=55 // pred_check
          %p496 = pneg %p100
        $region62: #{tpu_custom_call.1} parent=55 // pred_check_branch
          %498 = sbr.rel (%p496) target = $region64
        $region63: #{tpu_custom_call.1} parent=55 // pred_region
          %s499 = sand.u32 %s30, 1
          %s500 = scalar_lea.sflag [#allocation7], %s499
          %s501 = sand.u32 %s90, 1
          %s502 = smul.addr %s501, 32
          %s503 = scalar_lea.vmem [#allocation6], %s502
          %s504 = smul.u32 4, %s38
          %s506 = ssub.s32 512, 512
          %507 = vsyncadd %s500, %s506
          %s508 = smul.addr %s37, 8
          %s509 = sadd.s32 %s504, %s508
          %s510 = smul.addr %s509, 128
          %s511 = scalar_lea.hbm %s1, %s510
          %s512 = sshll.u32 %s503, 4
          %s513 = int_to_ptr.vmem [resolvable:$true] %s512
          %518 = dma.hbm_to_vmem [thread:$0]  %s511, 512, %s513, %s500, 128, 128, 8
        $region64: #{tpu_custom_call.1} parent=55 // pred_fallthru
          _
        // Predicated region
        $region65: #{tpu_custom_call.1} parent=55 // pred_check
          %p519 = pneg %p136
        $region66: #{tpu_custom_call.1} parent=55 // pred_check_branch
          %521 = sbr.rel (%p519) target = $region68
        $region67: #{tpu_custom_call.1} parent=55 // pred_region
          %s522 = sand.u32 %s30, 1
          %s523 = scalar_lea.sflag [#allocation7], %s522
          %s524 = sand.u32 %s126, 1
          %s525 = smul.addr %s524, 16
          %s526 = scalar_lea.vmem [#allocation8], %s525
          %s527 = smul.u32 %s38, 2
          %s528 = sadd.s32 %s527, 2
          %p529 = scmp.lt.s32.totalorder %s528, 3
          %s530 = scalar_select %p529, %s528, 3
          %s531 = smul.u32 2, %s530
          %s533 = ssub.s32 256, 256
          %534 = vsyncadd %s523, %s533
          %s535 = smul.addr %s37, 8
          %s536 = sadd.s32 %s531, %s535
          %s537 = smul.addr %s536, 128
          %s538 = scalar_lea.hbm %s2, %s537
          %s539 = sshll.u32 %s526, 4
          %s540 = int_to_ptr.vmem [resolvable:$true] %s539
          %545 = dma.hbm_to_vmem [thread:$0]  %s538, 256, %s540, %s523, 128, 128, 8
        $region68: #{tpu_custom_call.1} parent=55 // pred_fallthru
          _
      $region56: #{tpu_custom_call.1} parent=5 // pred_fallthru
        _
      %p546 = scmp.le.s32.totalorder 1, %s30
      %p547 = scmp.lt.s32.totalorder %s30, 5
      %p548 = pnand %p546, %p547
      %p549 = pneg %p548
      // Predicated region
      $region69: #{tpu_custom_call.1} parent=5 // pred_check
        _
      $region70: #{tpu_custom_call.1} parent=5 // pred_check_branch
        %551 = sbr.rel (%p548) target = $region72
      $region71: #{tpu_custom_call.1} parent=5 // pred_region
        %s552 = ssub.s32 %s30, 1
        %s553 = sand.u32 %s65, 1
        %s554 = scalar_lea.sflag [#allocation4], %s553
        %s555 = sand.u32 %s65, 1
        %s556 = smul.addr %s555, 16
        %s557 = scalar_lea.vmem [#allocation3], %s556
        // Predicated region
        $region73: #{tpu_custom_call.1} parent=71 // pred_check
          %p558 = pneg %p78
        $region74: #{tpu_custom_call.1} parent=71 // pred_check_branch
          %560 = sbr.rel (%p558) target = $region76
        $region75: #{tpu_custom_call.1} parent=71 // pred_region
          %561 = dma.done %s554, 256
        $region76: #{tpu_custom_call.1} parent=71 // pred_fallthru
          _
        %s562 = sand.u32 %s35, 1
        %s563 = scalar_lea.sflag [#allocation7], %s562
        %s564 = sand.u32 %s93, 1
        %s565 = smul.addr %s564, 32
        %s566 = scalar_lea.vmem [#allocation6], %s565
        // Predicated region
        $region77: #{tpu_custom_call.1} parent=71 // pred_check
          %p567 = pneg %p106
        $region78: #{tpu_custom_call.1} parent=71 // pred_check_branch
          %569 = sbr.rel (%p567) target = $region80
        $region79: #{tpu_custom_call.1} parent=71 // pred_region
          %570 = dma.done %s563, 512
        $region80: #{tpu_custom_call.1} parent=71 // pred_fallthru
          _
        %s571 = sand.u32 %s35, 1
        %s572 = scalar_lea.sflag [#allocation7], %s571
        %s573 = sand.u32 %s129, 1
        %s574 = smul.addr %s573, 16
        %s575 = scalar_lea.vmem [#allocation8], %s574
        // Predicated region
        $region81: #{tpu_custom_call.1} parent=71 // pred_check
          %p576 = pneg %p142
        $region82: #{tpu_custom_call.1} parent=71 // pred_check_branch
          %578 = sbr.rel (%p576) target = $region84
        $region83: #{tpu_custom_call.1} parent=71 // pred_region
          %579 = dma.done %s572, 256
        $region84: #{tpu_custom_call.1} parent=71 // pred_fallthru
          _
        // Predicated region
        $region85: #{tpu_custom_call.1} parent=71 // pred_check
          %p580 = pneg %p205
        $region86: #{tpu_custom_call.1} parent=71 // pred_check_branch
          %582 = sbr.rel (%p580) target = $region88
        $region87: #{tpu_custom_call.1} parent=71 // pred_region
          %583 = dma.done [#allocation10], 1024
        $region88: #{tpu_custom_call.1} parent=71 // pred_fallthru
          _
        // Predicated region
        $region89: #{tpu_custom_call.1} parent=71 // pred_check
          %p584 = pneg %p247
        $region90: #{tpu_custom_call.1} parent=71 // pred_check_branch
          %586 = sbr.rel (%p584) target = $region92
        $region91: #{tpu_custom_call.1} parent=71 // pred_region
          %587 = dma.done [#allocation10], 1024
        $region92: #{tpu_custom_call.1} parent=71 // pred_fallthru
          _
        // Predicated region
        $region93: #{tpu_custom_call.1} parent=71 // pred_check
          %p588 = pneg %p289
        $region94: #{tpu_custom_call.1} parent=71 // pred_check_branch
          %590 = sbr.rel (%p588) target = $region96
        $region95: #{tpu_custom_call.1} parent=71 // pred_region
          %591 = dma.done [#allocation13], 512
        $region96: #{tpu_custom_call.1} parent=71 // pred_fallthru
          _
        // Predicated region
        $region97: #{tpu_custom_call.1} parent=71 // pred_check
          %p592 = pneg %p331
        $region98: #{tpu_custom_call.1} parent=71 // pred_check_branch
          %594 = sbr.rel (%p592) target = $region100
        $region99: #{tpu_custom_call.1} parent=71 // pred_region
          %595 = dma.done [#allocation13], 1024
        $region100: #{tpu_custom_call.1} parent=71 // pred_fallthru
          _
        %s596 = sand.u32 %s65, 1
        %s597 = scalar_lea.sflag [#allocation4], %s596
        %s598 = sand.u32 %s65, 1
        %s599 = smul.addr %s598, 16
        %s600 = scalar_lea.vmem [#allocation3], %s599
        %p601 = pneg %p78
        %p602 = pneg %p75
        %s603 = sand.u32 %s35, 1
        %s604 = scalar_lea.sflag [#allocation7], %s603
        %s605 = sand.u32 %s93, 1
        %s606 = smul.addr %s605, 32
        %s607 = scalar_lea.vmem [#allocation6], %s606
        %p608 = pneg %p106
        %p609 = pneg %p103
        %s610 = sand.u32 %s35, 1
        %s611 = scalar_lea.sflag [#allocation7], %s610
        %s612 = sand.u32 %s129, 1
        %s613 = smul.addr %s612, 16
        %s614 = scalar_lea.vmem [#allocation8], %s613
        %p615 = pneg %p142
        %p616 = pneg %p139
        %p617 = pneg %p163
        %p618 = pneg %p160
        %p619 = pneg %p184
        %p620 = pneg %p181
        %p621 = pneg %p205
        %p622 = pneg %p202
        %p623 = pneg %p226
        %p624 = pneg %p223
        %p625 = pneg %p247
        %p626 = pneg %p244
        %p627 = pneg %p268
        %p628 = pneg %p265
        %p629 = pneg %p289
        %p630 = pneg %p286
        %p631 = pneg %p310
        %p632 = pneg %p307
        %p633 = pneg %p331
        %p634 = pneg %p328
        %p635 = pneg %p352
        %p636 = pneg %p349
        %p637 = pneg %p380
        %p638 = pneg %p377
        %s639 = sand.u32 %s367, 1
        %s640 = scalar_lea.sflag [#allocation5], %s639
        %s641 = sand.u32 %s367, 1
        %s642 = smul.addr %s641, 32
        %s643 = scalar_lea.vmem [#allocation15], %s642
        %s644 = smul.u32 %s40, 2
        %s645 = ssub.s32 %s644, 1
        %p646 = scmp.gt.s32.totalorder %s645, 0
        %s647 = scalar_select %p646, %s645, 0
        %s648 = smul.u32 2, %s647
        %s649 = smul.u32 4, %s40
        %s650 = smul.u32 %s40, 2
        %s651 = sadd.s32 %s650, 2
        %p652 = scmp.lt.s32.totalorder %s651, 3
        %s653 = scalar_select %p652, %s651, 3
        %s654 = smul.u32 2, %s653
        %s655 = smul.u32 4, %s40
        %v657 = vld [vmem:[%s3] sm:$0x1]
        %v658 = vld [vmem:[%s4] sm:$0x1]
        %v659 = vld [vmem:[#allocation9] sm:$0xf]
        %v660 = vld [vmem:[#allocation9 + $0x4] sm:$0xf]
        %v661 = vld [vmem:[#allocation9 + $0x8] sm:$0xf]
        %v662 = vld [vmem:[#allocation9 + $0xc] sm:$0xf]
        %v663 = vld [vmem:[#allocation9 + $0x10] sm:$0xf]
        %v664 = vld [vmem:[#allocation9 + $0x14] sm:$0xf]
        %v665 = vld [vmem:[#allocation9 + $0x18] sm:$0xf]
        %v666 = vld [vmem:[#allocation9 + $0x1c] sm:$0xf]
        %v667 = vld [vmem:[#allocation9 + $0x20] sm:$0xf]
        %v668 = vld [vmem:[#allocation9 + $0x24] sm:$0xf]
        %v669 = vld [vmem:[#allocation9 + $0x28] sm:$0xf]
        %v670 = vld [vmem:[#allocation9 + $0x2c] sm:$0xf]
        %v671 = vld [vmem:[#allocation9 + $0x30] sm:$0xf]
        %v672 = vld [vmem:[#allocation9 + $0x34] sm:$0xf]
        %v673 = vld [vmem:[#allocation9 + $0x38] sm:$0xf]
        %v674 = vld [vmem:[#allocation9 + $0x3c] sm:$0xf]
        %v675 = vld [vmem:[#allocation11] sm:$0xf]
        %v676 = vld [vmem:[#allocation11 + $0x4] sm:$0xf]
        %v677 = vld [vmem:[#allocation11 + $0x8] sm:$0xf]
        %v678 = vld [vmem:[#allocation11 + $0xc] sm:$0xf]
        %v679 = vld [vmem:[#allocation11 + $0x10] sm:$0xf]
        %v680 = vld [vmem:[#allocation11 + $0x14] sm:$0xf]
        %v681 = vld [vmem:[#allocation11 + $0x18] sm:$0xf]
        %v682 = vld [vmem:[#allocation11 + $0x1c] sm:$0xf]
        %v683 = vld [vmem:[#allocation11 + $0x20] sm:$0xf]
        %v684 = vld [vmem:[#allocation11 + $0x24] sm:$0xf]
        %v685 = vld [vmem:[#allocation11 + $0x28] sm:$0xf]
        %v686 = vld [vmem:[#allocation11 + $0x2c] sm:$0xf]
        %v687 = vld [vmem:[#allocation11 + $0x30] sm:$0xf]
        %v688 = vld [vmem:[#allocation11 + $0x34] sm:$0xf]
        %v689 = vld [vmem:[#allocation11 + $0x38] sm:$0xf]
        %v690 = vld [vmem:[#allocation11 + $0x3c] sm:$0xf]
        %v691 = vld [vmem:[%s6] sm:$0x1]
        %v692 = vld [vmem:[%s8] sm:$0x1]
        %v693 = vlaneseq
        %v694 = vshrl.u32 %v693, 7
        %v695 = vadd.s32 %v694, 8
        %s696 = smul.u32 %s40, 32
        %s697 = ssub.s32 %s696, 16
        %v698 = vstv %s697
        %v699 = vadd.s32 %v694, %v698
        %v700 = vadd.s32 %v695, %v698
        %vm701 = vcmp.ge.s32.totalorder %v699, 0
        %vm702 = vcmp.ge.s32.totalorder %v700, 0
        %v703 = vld [vmem:[%s557] sm:$0xff]
        %v704 = vld [vmem:[%s557 + $0x8] sm:$0xff]
        %705 = vadd.xlane.f32.xlu0 %v703
        %v706 = vpop.xlane.xlu0 %705
        %707 = vadd.xlane.f32.xlu0 %v704
        %v708 = vpop.xlane.xlu0 %707
        %v709 = vmul.f32 %v703, %v703
        %v710 = vmul.f32 %v704, %v704
        %711 = vadd.xlane.f32.xlu0 %v709
        %v712 = vpop.xlane.xlu0 %711
        %713 = vadd.xlane.f32.xlu0 %v710
        %v714 = vpop.xlane.xlu0 %713
        %v715 = vmul.f32 %v706, 0.03125
        %v716 = vmul.f32 %v708, 0.03125
        %v717 = vmul.f32 %v712, 0.03125
        %v718 = vmul.f32 %v714, 0.03125
        %v719 = vmul.f32 %v715, %v715
        %v720 = vmul.f32 %v716, %v716
        %v721 = vsub.f32 %v717, %v719
        %v722 = vsub.f32 %v718, %v720
        %v723 = vsub.f32 %v703, %v715
        %v724 = vsub.f32 %v704, %v716
        %v725 = vadd.f32 %v721, 1e-05
        %v726 = vadd.f32 %v722, 1e-05
        %v727 = vrsqrt.pop %v725
        %v728 = vrsqrt.pop %v726
        %v729 = vmul.f32 %v723, %v727
        %v730 = vmul.f32 %v724, %v728
        %v732 = vlaneseq
        %v733 = vshrl.u32 %v732, 7
        %v734 = vsub.s32 0, %v733
        %v735 = vrot.slane %v657, %v734
        %v737 = vmul.f32 %v729, %v735
        %v738 = vmul.f32 %v730, %v735
        %v740 = vlaneseq
        %v741 = vshrl.u32 %v740, 7
        %v742 = vsub.s32 0, %v741
        %v743 = vrot.slane %v658, %v742
        %v745 = vadd.f32 %v737, %v743
        %v746 = vadd.f32 %v738, %v743
        %v747 = vpack.c.bf16 %v746, %v745
        %v749 = vlaneseq
        %v750 = vshrl.u32 %v749, 7
        %v751 = vsub.s32 0, %v750
        %v752 = vrot.slane %v691, %v751
        %v770 = vunpack.c.l.b16 %v659
        %v771 = vunpack.c.l.b16 %v660
        %v772 = vunpack.c.l.b16 %v661
        %v773 = vunpack.c.l.b16 %v662
        %v774 = vunpack.c.l.b16 %v663
        %v775 = vunpack.c.l.b16 %v664
        %v776 = vunpack.c.l.b16 %v665
        %v777 = vunpack.c.l.b16 %v666
        %v778 = vunpack.c.l.b16 %v667
        %v779 = vunpack.c.l.b16 %v668
        %v780 = vunpack.c.l.b16 %v669
        %v781 = vunpack.c.l.b16 %v670
        %v782 = vunpack.c.l.b16 %v671
        %v783 = vunpack.c.l.b16 %v672
        %v784 = vunpack.c.l.b16 %v673
        %v785 = vunpack.c.l.b16 %v674
        %v786 = vpack.c.b16 %v771, %v770
        %v787 = vpack.c.b16 %v773, %v772
        %v788 = vpack.c.b16 %v775, %v774
        %v789 = vpack.c.b16 %v777, %v776
        %v790 = vpack.c.b16 %v779, %v778
        %v791 = vpack.c.b16 %v781, %v780
        %v792 = vpack.c.b16 %v783, %v782
        %v793 = vpack.c.b16 %v785, %v784
        %802 = vmatprep.subr.bf16.mxu0 0
        %803 = vmatpush1.bf16.msra.mxu0 %v793
        %804 = vmatprep.subr.bf16.mxu0 0
        %805 = vmatpush1.bf16.msra.mxu0 %v792
        %806 = vmatprep.subr.bf16.mxu0 0
        %807 = vmatpush1.bf16.msra.mxu0 %v791
        %808 = vmatprep.subr.bf16.mxu0 0
        %809 = vmatpush1.bf16.msra.mxu0 %v790
        %810 = vmatprep.subr.bf16.mxu0 0
        %811 = vmatpush1.bf16.msra.mxu0 %v789
        %812 = vmatprep.subr.bf16.mxu0 0
        %813 = vmatpush1.bf16.msra.mxu0 %v788
        %814 = vmatprep.subr.bf16.mxu0 0
        %815 = vmatpush1.bf16.msra.mxu0 %v787
        %816 = vmatprep.subr.bf16.mxu0 0
        %817 = vmatpush1.bf16.msra.mxu0 %v786
        %818 = vmatprep.subr.bf16.mxu0 0
        %819 = vmatpush2.bf16.msra.mxu0 0
        %820 = vmatprep.subr.bf16.mxu0 0
        %821 = vmatpush2.bf16.msra.mxu0 0
        %822 = vmatprep.subr.bf16.mxu0 0
        %823 = vmatpush2.bf16.msra.mxu0 0
        %824 = vmatprep.subr.bf16.mxu0 0
        %825 = vmatpush2.bf16.msra.mxu0 0
        %826 = vmatprep.subr.bf16.mxu0 0
        %827 = vmatpush2.bf16.msra.mxu0 0
        %828 = vmatprep.subr.bf16.mxu0 0
        %829 = vmatpush2.bf16.msra.mxu0 0
        %830 = vmatprep.subr.bf16.mxu0 0
        %831 = vmatpush2.bf16.msra.mxu0 0
        %832 = vmatprep.subr.bf16.mxu0 0
        %833 = vmatpush2.bf16.msra.mxu0 0
        %834 = vmatprep.mubr.bf16.mxu0 0
        %835 = vmatmul.mubr.bf16.gmra.mxu0 %v747
        %v836 = vpop.f32.mrf.mxu0
        %v837 = vadd.f32 %v752, %v836
        %v838 = vpop.f32.mrf.mxu0
        %v839 = vpop.f32.mrf.mxu0
        %v840 = vadd.f32 %v752, %v839
        %v841 = vpop.f32.mrf.mxu0
        %842 = vdwg.mxu0
        %v844 = vlaneseq
        %v845 = vshrl.u32 %v844, 7
        %v846 = vsub.s32 0, %v845
        %v847 = vrot.slane %v692, %v846
        %v865 = vunpack.c.l.b16 %v675
        %v866 = vunpack.c.l.b16 %v676
        %v867 = vunpack.c.l.b16 %v677
        %v868 = vunpack.c.l.b16 %v678
        %v869 = vunpack.c.l.b16 %v679
        %v870 = vunpack.c.l.b16 %v680
        %v871 = vunpack.c.l.b16 %v681
        %v872 = vunpack.c.l.b16 %v682
        %v873 = vunpack.c.l.b16 %v683
        %v874 = vunpack.c.l.b16 %v684
        %v875 = vunpack.c.l.b16 %v685
        %v876 = vunpack.c.l.b16 %v686
        %v877 = vunpack.c.l.b16 %v687
        %v878 = vunpack.c.l.b16 %v688
        %v879 = vunpack.c.l.b16 %v689
        %v880 = vunpack.c.l.b16 %v690
        %v881 = vpack.c.b16 %v866, %v865
        %v882 = vpack.c.b16 %v868, %v867
        %v883 = vpack.c.b16 %v870, %v869
        %v884 = vpack.c.b16 %v872, %v871
        %v885 = vpack.c.b16 %v874, %v873
        %v886 = vpack.c.b16 %v876, %v875
        %v887 = vpack.c.b16 %v878, %v877
        %v888 = vpack.c.b16 %v880, %v879
        %897 = vmatprep.subr.bf16.mxu0 0
        %898 = vmatpush1.bf16.msra.mxu0 %v888
        %899 = vmatprep.subr.bf16.mxu0 0
        %900 = vmatpush1.bf16.msra.mxu0 %v887
        %901 = vmatprep.subr.bf16.mxu0 0
        %902 = vmatpush1.bf16.msra.mxu0 %v886
        %903 = vmatprep.subr.bf16.mxu0 0
        %904 = vmatpush1.bf16.msra.mxu0 %v885
        %905 = vmatprep.subr.bf16.mxu0 0
        %906 = vmatpush1.bf16.msra.mxu0 %v884
        %907 = vmatprep.subr.bf16.mxu0 0
        %908 = vmatpush1.bf16.msra.mxu0 %v883
        %909 = vmatprep.subr.bf16.mxu0 0
        %910 = vmatpush1.bf16.msra.mxu0 %v882
        %911 = vmatprep.subr.bf16.mxu0 0
        %912 = vmatpush1.bf16.msra.mxu0 %v881
        %913 = vmatprep.subr.bf16.mxu0 0
        %914 = vmatpush2.bf16.msra.mxu0 0
        %915 = vmatprep.subr.bf16.mxu0 0
        %916 = vmatpush2.bf16.msra.mxu0 0
        %917 = vmatprep.subr.bf16.mxu0 0
        %918 = vmatpush2.bf16.msra.mxu0 0
        %919 = vmatprep.subr.bf16.mxu0 0
        %920 = vmatpush2.bf16.msra.mxu0 0
        %921 = vmatprep.subr.bf16.mxu0 0
        %922 = vmatpush2.bf16.msra.mxu0 0
        %923 = vmatprep.subr.bf16.mxu0 0
        %924 = vmatpush2.bf16.msra.mxu0 0
        %925 = vmatprep.subr.bf16.mxu0 0
        %926 = vmatpush2.bf16.msra.mxu0 0
        %927 = vmatprep.subr.bf16.mxu0 0
        %928 = vmatpush2.bf16.msra.mxu0 0
        %929 = vmatprep.mubr.bf16.mxu0 0
        %930 = vmatmul.mubr.bf16.gmra.mxu0 %v747
        %v931 = vpop.f32.mrf.mxu0
        %v932 = vadd.f32 %v847, %v931
        %v933 = vpop.f32.mrf.mxu0
        %v934 = vpop.f32.mrf.mxu0
        %v935 = vadd.f32 %v847, %v934
        %v936 = vpop.f32.mrf.mxu0
        %937 = vdwg.mxu0
        %v938 = vxor.u32 %v932, 2147483648
        %v939 = vxor.u32 %v935, 2147483648
        %v940 = vmul.f32 %v938, 1.442695
        %v941 = vpow.pop %v940
        %v942 = vmul.f32 %v939, 1.442695
        %v943 = vpow.pop %v942
        %v944 = vadd.f32 %v941, 1.0
        %v945 = vadd.f32 %v943, 1.0
        %v946 = vrcp.pop %v944
        %v947 = vmul.f32 1.0, %v946
        %v948 = vrcp.pop %v945
        %v949 = vmul.f32 1.0, %v948
        %v950 = vmul.f32 %v837, %v947
        %v951 = vmul.f32 %v840, %v949
        %v952 = vsel %vm701, 1, 0
        %v953 = vsel %vm702, 1, 0
        %vm954 = vcmp.eq.s32.totalorder %v952, 1
        %vm955 = vcmp.eq.s32.totalorder %v953, 1
        %v956 = vsel %vm954, %v950, 0.0
        %v957 = vsel %vm955, %v951, 0.0
        %958 = vst [vmem:[#allocation2] sm:$0xff] %v956
        %959 = vst [vmem:[#allocation2 + $0x8] sm:$0xff] %v957
        %s960 = sadd.s32 %s696, 32
        %v961 = vstv %s960
        %v962 = vadd.s32 %v694, %v961
        %v963 = vadd.s32 %v695, %v961
        %vm964 = vcmp.lt.s32.totalorder %v962, 64
        %vm965 = vcmp.lt.s32.totalorder %v963, 64
        %v966 = vld [vmem:[%s575] sm:$0xff]
        %v967 = vld [vmem:[%s575 + $0x8] sm:$0xff]
        %968 = vadd.xlane.f32.xlu0 %v966
        %v969 = vpop.xlane.xlu0 %968
        %970 = vadd.xlane.f32.xlu0 %v967
        %v971 = vpop.xlane.xlu0 %970
        %v972 = vmul.f32 %v966, %v966
        %v973 = vmul.f32 %v967, %v967
        %974 = vadd.xlane.f32.xlu0 %v972
        %v975 = vpop.xlane.xlu0 %974
        %976 = vadd.xlane.f32.xlu0 %v973
        %v977 = vpop.xlane.xlu0 %976
        %v978 = vmul.f32 %v969, 0.03125
        %v979 = vmul.f32 %v971, 0.03125
        %v980 = vmul.f32 %v975, 0.03125
        %v981 = vmul.f32 %v977, 0.03125
        %v982 = vmul.f32 %v978, %v978
        %v983 = vmul.f32 %v979, %v979
        %v984 = vsub.f32 %v980, %v982
        %v985 = vsub.f32 %v981, %v983
        %v986 = vsub.f32 %v966, %v978
        %v987 = vsub.f32 %v967, %v979
        %v988 = vadd.f32 %v984, 1e-05
        %v989 = vadd.f32 %v985, 1e-05
        %v990 = vrsqrt.pop %v988
        %v991 = vrsqrt.pop %v989
        %v992 = vmul.f32 %v986, %v990
        %v993 = vmul.f32 %v987, %v991
        %v994 = vmul.f32 %v992, %v735
        %v995 = vmul.f32 %v993, %v735
        %v996 = vadd.f32 %v994, %v743
        %v997 = vadd.f32 %v995, %v743
        %v998 = vpack.c.bf16 %v997, %v996
        %999 = vmatprep.subr.bf16.mxu0 0
        %1000 = vmatpush1.bf16.msra.mxu0 %v793
        %1001 = vmatprep.subr.bf16.mxu0 0
        %1002 = vmatpush1.bf16.msra.mxu0 %v792
        %1003 = vmatprep.subr.bf16.mxu0 0
        %1004 = vmatpush1.bf16.msra.mxu0 %v791
        %1005 = vmatprep.subr.bf16.mxu0 0
        %1006 = vmatpush1.bf16.msra.mxu0 %v790
        %1007 = vmatprep.subr.bf16.mxu0 0
        %1008 = vmatpush1.bf16.msra.mxu0 %v789
        %1009 = vmatprep.subr.bf16.mxu0 0
        %1010 = vmatpush1.bf16.msra.mxu0 %v788
        %1011 = vmatprep.subr.bf16.mxu0 0
        %1012 = vmatpush1.bf16.msra.mxu0 %v787
        %1013 = vmatprep.subr.bf16.mxu0 0
        %1014 = vmatpush1.bf16.msra.mxu0 %v786
        %1015 = vmatprep.subr.bf16.mxu0 0
        %1016 = vmatpush2.bf16.msra.mxu0 0
        %1017 = vmatprep.subr.bf16.mxu0 0
        %1018 = vmatpush2.bf16.msra.mxu0 0
        %1019 = vmatprep.subr.bf16.mxu0 0
        %1020 = vmatpush2.bf16.msra.mxu0 0
        %1021 = vmatprep.subr.bf16.mxu0 0
        %1022 = vmatpush2.bf16.msra.mxu0 0
        %1023 = vmatprep.subr.bf16.mxu0 0
        %1024 = vmatpush2.bf16.msra.mxu0 0
        %1025 = vmatprep.subr.bf16.mxu0 0
        %1026 = vmatpush2.bf16.msra.mxu0 0
        %1027 = vmatprep.subr.bf16.mxu0 0
        %1028 = vmatpush2.bf16.msra.mxu0 0
        %1029 = vmatprep.subr.bf16.mxu0 0
        %1030 = vmatpush2.bf16.msra.mxu0 0
        %1031 = vmatprep.mubr.bf16.mxu0 0
        %1032 = vmatmul.mubr.bf16.gmra.mxu0 %v998
        %v1033 = vpop.f32.mrf.mxu0
        %v1034 = vadd.f32 %v752, %v1033
        %v1035 = vpop.f32.mrf.mxu0
        %v1036 = vpop.f32.mrf.mxu0
        %v1037 = vadd.f32 %v752, %v1036
        %v1038 = vpop.f32.mrf.mxu0
        %1039 = vdwg.mxu0
        %1040 = vmatprep.subr.bf16.mxu0 0
        %1041 = vmatpush1.bf16.msra.mxu0 %v888
        %1042 = vmatprep.subr.bf16.mxu0 0
        %1043 = vmatpush1.bf16.msra.mxu0 %v887
        %1044 = vmatprep.subr.bf16.mxu0 0
        %1045 = vmatpush1.bf16.msra.mxu0 %v886
        %1046 = vmatprep.subr.bf16.mxu0 0
        %1047 = vmatpush1.bf16.msra.mxu0 %v885
        %1048 = vmatprep.subr.bf16.mxu0 0
        %1049 = vmatpush1.bf16.msra.mxu0 %v884
        %1050 = vmatprep.subr.bf16.mxu0 0
        %1051 = vmatpush1.bf16.msra.mxu0 %v883
        %1052 = vmatprep.subr.bf16.mxu0 0
        %1053 = vmatpush1.bf16.msra.mxu0 %v882
        %1054 = vmatprep.subr.bf16.mxu0 0
        %1055 = vmatpush1.bf16.msra.mxu0 %v881
        %1056 = vmatprep.subr.bf16.mxu0 0
        %1057 = vmatpush2.bf16.msra.mxu0 0
        %1058 = vmatprep.subr.bf16.mxu0 0
        %1059 = vmatpush2.bf16.msra.mxu0 0
        %1060 = vmatprep.subr.bf16.mxu0 0
        %1061 = vmatpush2.bf16.msra.mxu0 0
        %1062 = vmatprep.subr.bf16.mxu0 0
        %1063 = vmatpush2.bf16.msra.mxu0 0
        %1064 = vmatprep.subr.bf16.mxu0 0
        %1065 = vmatpush2.bf16.msra.mxu0 0
        %1066 = vmatprep.subr.bf16.mxu0 0
        %1067 = vmatpush2.bf16.msra.mxu0 0
        %1068 = vmatprep.subr.bf16.mxu0 0
        %1069 = vmatpush2.bf16.msra.mxu0 0
        %1070 = vmatprep.subr.bf16.mxu0 0
        %1071 = vmatpush2.bf16.msra.mxu0 0
        %1072 = vmatprep.mubr.bf16.mxu0 0
        %1073 = vmatmul.mubr.bf16.gmra.mxu0 %v998
        %v1074 = vpop.f32.mrf.mxu0
        %v1075 = vadd.f32 %v847, %v1074
        %v1076 = vpop.f32.mrf.mxu0
        %v1077 = vpop.f32.mrf.mxu0
        %v1078 = vadd.f32 %v847, %v1077
        %v1079 = vpop.f32.mrf.mxu0
        %1080 = vdwg.mxu0
        %v1081 = vxor.u32 %v1075, 2147483648
        %v1082 = vxor.u32 %v1078, 2147483648
        %v1083 = vmul.f32 %v1081, 1.442695
        %v1084 = vpow.pop %v1083
        %v1085 = vmul.f32 %v1082, 1.442695
        %v1086 = vpow.pop %v1085
        %v1087 = vadd.f32 %v1084, 1.0
        %v1088 = vadd.f32 %v1086, 1.0
        %v1089 = vrcp.pop %v1087
        %v1090 = vmul.f32 1.0, %v1089
        %v1091 = vrcp.pop %v1088
        %v1092 = vmul.f32 1.0, %v1091
        %v1093 = vmul.f32 %v1034, %v1090
        %v1094 = vmul.f32 %v1037, %v1092
        %v1095 = vsel %vm964, 1, 0
        %v1096 = vsel %vm965, 1, 0
        %vm1097 = vcmp.eq.s32.totalorder %v1095, 1
        %vm1098 = vcmp.eq.s32.totalorder %v1096, 1
        %v1099 = vsel %vm1097, %v1093, 0.0
        %v1100 = vsel %vm1098, %v1094, 0.0
        %1101 = vst [vmem:[#allocation2 + $0x30] sm:$0xff] %v1099
        %1102 = vst [vmem:[#allocation2 + $0x38] sm:$0xff] %v1100
        %v1103 = vld [vmem:[%s566] sm:$0xff]
        %v1104 = vld [vmem:[%s566 + $0x8] sm:$0xff]
        %v1105 = vld [vmem:[%s566 + $0x10] sm:$0xff]
        %v1106 = vld [vmem:[%s566 + $0x18] sm:$0xff]
        %1107 = vadd.xlane.f32.xlu0 %v1103
        %v1108 = vpop.xlane.xlu0 %1107
        %1109 = vadd.xlane.f32.xlu0 %v1104
        %v1110 = vpop.xlane.xlu0 %1109
        %1111 = vadd.xlane.f32.xlu0 %v1105
        %v1112 = vpop.xlane.xlu0 %1111
        %1113 = vadd.xlane.f32.xlu0 %v1106
        %v1114 = vpop.xlane.xlu0 %1113
        %v1115 = vmul.f32 %v1103, %v1103
        %v1116 = vmul.f32 %v1104, %v1104
        %v1117 = vmul.f32 %v1105, %v1105
        %v1118 = vmul.f32 %v1106, %v1106
        %1119 = vadd.xlane.f32.xlu0 %v1115
        %v1120 = vpop.xlane.xlu0 %1119
        %1121 = vadd.xlane.f32.xlu0 %v1116
        %v1122 = vpop.xlane.xlu0 %1121
        %1123 = vadd.xlane.f32.xlu0 %v1117
        %v1124 = vpop.xlane.xlu0 %1123
        %1125 = vadd.xlane.f32.xlu0 %v1118
        %v1126 = vpop.xlane.xlu0 %1125
        %v1127 = vmul.f32 %v1108, 0.03125
        %v1128 = vmul.f32 %v1110, 0.03125
        %v1129 = vmul.f32 %v1112, 0.03125
        %v1130 = vmul.f32 %v1114, 0.03125
        %v1131 = vmul.f32 %v1120, 0.03125
        %v1132 = vmul.f32 %v1122, 0.03125
        %v1133 = vmul.f32 %v1124, 0.03125
        %v1134 = vmul.f32 %v1126, 0.03125
        %v1135 = vmul.f32 %v1127, %v1127
        %v1136 = vmul.f32 %v1128, %v1128
        %v1137 = vmul.f32 %v1129, %v1129
        %v1138 = vmul.f32 %v1130, %v1130
        %v1139 = vsub.f32 %v1131, %v1135
        %v1140 = vsub.f32 %v1132, %v1136
        %v1141 = vsub.f32 %v1133, %v1137
        %v1142 = vsub.f32 %v1134, %v1138
        %v1143 = vsub.f32 %v1103, %v1127
        %v1144 = vsub.f32 %v1104, %v1128
        %v1145 = vsub.f32 %v1105, %v1129
        %v1146 = vsub.f32 %v1106, %v1130
        %v1147 = vadd.f32 %v1139, 1e-05
        %v1148 = vadd.f32 %v1140, 1e-05
        %v1149 = vadd.f32 %v1141, 1e-05
        %v1150 = vadd.f32 %v1142, 1e-05
        %v1151 = vrsqrt.pop %v1147
        %v1152 = vrsqrt.pop %v1148
        %v1153 = vrsqrt.pop %v1149
        %v1154 = vrsqrt.pop %v1150
        %v1155 = vmul.f32 %v1143, %v1151
        %v1156 = vmul.f32 %v1144, %v1152
        %v1157 = vmul.f32 %v1145, %v1153
        %v1158 = vmul.f32 %v1146, %v1154
        %v1159 = vmul.f32 %v1155, %v735
        %v1160 = vmul.f32 %v1156, %v735
        %v1161 = vmul.f32 %v1157, %v735
        %v1162 = vmul.f32 %v1158, %v735
        %v1163 = vadd.f32 %v1159, %v743
        %v1164 = vadd.f32 %v1160, %v743
        %v1165 = vadd.f32 %v1161, %v743
        %v1166 = vadd.f32 %v1162, %v743
        %v1167 = vpack.c.bf16 %v1164, %v1163
        %v1168 = vpack.c.bf16 %v1166, %v1165
        %1169 = vmatprep.subr.bf16.mxu0 0
        %1170 = vmatpush1.bf16.msra.mxu0 %v793
        %1171 = vmatprep.subr.bf16.mxu0 0
        %1172 = vmatpush1.bf16.msra.mxu0 %v792
        %1173 = vmatprep.subr.bf16.mxu0 0
        %1174 = vmatpush1.bf16.msra.mxu0 %v791
        %1175 = vmatprep.subr.bf16.mxu0 0
        %1176 = vmatpush1.bf16.msra.mxu0 %v790
        %1177 = vmatprep.subr.bf16.mxu0 0
        %1178 = vmatpush1.bf16.msra.mxu0 %v789
        %1179 = vmatprep.subr.bf16.mxu0 0
        %1180 = vmatpush1.bf16.msra.mxu0 %v788
        %1181 = vmatprep.subr.bf16.mxu0 0
        %1182 = vmatpush1.bf16.msra.mxu0 %v787
        %1183 = vmatprep.subr.bf16.mxu0 0
        %1184 = vmatpush1.bf16.msra.mxu0 %v786
        %1185 = vmatprep.subr.bf16.mxu0 0
        %1186 = vmatpush2.bf16.msra.mxu0 0
        %1187 = vmatprep.subr.bf16.mxu0 0
        %1188 = vmatpush2.bf16.msra.mxu0 0
        %1189 = vmatprep.subr.bf16.mxu0 0
        %1190 = vmatpush2.bf16.msra.mxu0 0
        %1191 = vmatprep.subr.bf16.mxu0 0
        %1192 = vmatpush2.bf16.msra.mxu0 0
        %1193 = vmatprep.subr.bf16.mxu0 0
        %1194 = vmatpush2.bf16.msra.mxu0 0
        %1195 = vmatprep.subr.bf16.mxu0 0
        %1196 = vmatpush2.bf16.msra.mxu0 0
        %1197 = vmatprep.subr.bf16.mxu0 0
        %1198 = vmatpush2.bf16.msra.mxu0 0
        %1199 = vmatprep.subr.bf16.mxu0 0
        %1200 = vmatpush2.bf16.msra.mxu0 0
        %1201 = vmatprep.mubr.bf16.mxu0 0
        %1202 = vmatmul.mubr.bf16.gmra.mxu0 %v1167
        %v1203 = vpop.f32.mrf.mxu0
        %v1204 = vadd.f32 %v752, %v1203
        %v1205 = vpop.f32.mrf.mxu0
        %v1206 = vpop.f32.mrf.mxu0
        %v1207 = vadd.f32 %v752, %v1206
        %v1208 = vpop.f32.mrf.mxu0
        %1209 = vmatprep.mubr.bf16.mxu0 0
        %1210 = vmatmul.mubr.bf16.gmra.mxu0 %v1168
        %v1211 = vpop.f32.mrf.mxu0
        %v1212 = vadd.f32 %v752, %v1211
        %v1213 = vpop.f32.mrf.mxu0
        %v1214 = vpop.f32.mrf.mxu0
        %v1215 = vadd.f32 %v752, %v1214
        %v1216 = vpop.f32.mrf.mxu0
        %1217 = vdwg.mxu0
        %1218 = vmatprep.subr.bf16.mxu0 0
        %1219 = vmatpush1.bf16.msra.mxu0 %v888
        %1220 = vmatprep.subr.bf16.mxu0 0
        %1221 = vmatpush1.bf16.msra.mxu0 %v887
        %1222 = vmatprep.subr.bf16.mxu0 0
        %1223 = vmatpush1.bf16.msra.mxu0 %v886
        %1224 = vmatprep.subr.bf16.mxu0 0
        %1225 = vmatpush1.bf16.msra.mxu0 %v885
        %1226 = vmatprep.subr.bf16.mxu0 0
        %1227 = vmatpush1.bf16.msra.mxu0 %v884
        %1228 = vmatprep.subr.bf16.mxu0 0
        %1229 = vmatpush1.bf16.msra.mxu0 %v883
        %1230 = vmatprep.subr.bf16.mxu0 0
        %1231 = vmatpush1.bf16.msra.mxu0 %v882
        %1232 = vmatprep.subr.bf16.mxu0 0
        %1233 = vmatpush1.bf16.msra.mxu0 %v881
        %1234 = vmatprep.subr.bf16.mxu0 0
        %1235 = vmatpush2.bf16.msra.mxu0 0
        %1236 = vmatprep.subr.bf16.mxu0 0
        %1237 = vmatpush2.bf16.msra.mxu0 0
        %1238 = vmatprep.subr.bf16.mxu0 0
        %1239 = vmatpush2.bf16.msra.mxu0 0
        %1240 = vmatprep.subr.bf16.mxu0 0
        %1241 = vmatpush2.bf16.msra.mxu0 0
        %1242 = vmatprep.subr.bf16.mxu0 0
        %1243 = vmatpush2.bf16.msra.mxu0 0
        %1244 = vmatprep.subr.bf16.mxu0 0
        %1245 = vmatpush2.bf16.msra.mxu0 0
        %1246 = vmatprep.subr.bf16.mxu0 0
        %1247 = vmatpush2.bf16.msra.mxu0 0
        %1248 = vmatprep.subr.bf16.mxu0 0
        %1249 = vmatpush2.bf16.msra.mxu0 0
        %1250 = vmatprep.mubr.bf16.mxu0 0
        %1251 = vmatmul.mubr.bf16.gmra.mxu0 %v1167
        %v1252 = vpop.f32.mrf.mxu0
        %v1253 = vadd.f32 %v847, %v1252
        %v1254 = vpop.f32.mrf.mxu0
        %v1255 = vpop.f32.mrf.mxu0
        %v1256 = vadd.f32 %v847, %v1255
        %v1257 = vpop.f32.mrf.mxu0
        %1258 = vmatprep.mubr.bf16.mxu0 0
        %1259 = vmatmul.mubr.bf16.gmra.mxu0 %v1168
        %v1260 = vpop.f32.mrf.mxu0
        %v1261 = vadd.f32 %v847, %v1260
        %v1262 = vpop.f32.mrf.mxu0
        %v1263 = vpop.f32.mrf.mxu0
        %v1264 = vadd.f32 %v847, %v1263
        %v1265 = vpop.f32.mrf.mxu0
        %1266 = vdwg.mxu0
        %v1267 = vxor.u32 %v1253, 2147483648
        %v1268 = vxor.u32 %v1256, 2147483648
        %v1269 = vxor.u32 %v1261, 2147483648
        %v1270 = vxor.u32 %v1264, 2147483648
        %v1271 = vmul.f32 %v1267, 1.442695
        %v1272 = vpow.pop %v1271
        %v1273 = vmul.f32 %v1268, 1.442695
        %v1274 = vpow.pop %v1273
        %v1275 = vmul.f32 %v1269, 1.442695
        %v1276 = vpow.pop %v1275
        %v1277 = vmul.f32 %v1270, 1.442695
        %v1278 = vpow.pop %v1277
        %v1279 = vadd.f32 %v1272, 1.0
        %v1280 = vadd.f32 %v1274, 1.0
        %v1281 = vadd.f32 %v1276, 1.0
        %v1282 = vadd.f32 %v1278, 1.0
        %v1283 = vrcp.pop %v1279
        %v1284 = vmul.f32 1.0, %v1283
        %v1285 = vrcp.pop %v1280
        %v1286 = vmul.f32 1.0, %v1285
        %v1287 = vrcp.pop %v1281
        %v1288 = vmul.f32 1.0, %v1287
        %v1289 = vrcp.pop %v1282
        %v1290 = vmul.f32 1.0, %v1289
        %v1291 = vmul.f32 %v1204, %v1284
        %v1292 = vmul.f32 %v1207, %v1286
        %v1293 = vmul.f32 %v1212, %v1288
        %v1294 = vmul.f32 %v1215, %v1290
        %1295 = vst [vmem:[#allocation2 + $0x10] sm:$0xff] %v1291
        %1296 = vst [vmem:[#allocation2 + $0x18] sm:$0xff] %v1292
        %1297 = vst [vmem:[#allocation2 + $0x20] sm:$0xff] %v1293
        %1298 = vst [vmem:[#allocation2 + $0x28] sm:$0xff] %v1294
        %v1299 = vld [vmem:[#allocation12] sm:$0xff]
        %v1300 = vld [vmem:[#allocation12 + $0x8] sm:$0xff]
        %v1301 = vld [vmem:[#allocation12 + $0x10] sm:$0xff]
        %v1302 = vld [vmem:[#allocation12 + $0x18] sm:$0x7f]
        %v1303 = vld [vmem:[#allocation2 + $0x8] sm:$0xff]
        %v1304 = vld [vmem:[#allocation2 + $0x10] sm:$0xff]
        %v1305 = vld [vmem:[#allocation2 + $0x18] sm:$0xff]
        %v1306 = vld [vmem:[#allocation2 + $0x20] sm:$0xff]
        %v1307 = vld [vmem:[#allocation2 + $0x28] sm:$0xff]
        %v1308 = vld [vmem:[#allocation2 + $0x30] sm:$0xff]
        %v1309 = vlaneseq
        %v1310 = vshrl.u32 %v1309, 7
        %v1311 = vsub.s32 7, %v1310
        %v1312 = vrot.slane %v1299, %v1311
        %v1313 = vmul.f32 %v1303, %v1312
        %v1314 = vmul.f32 %v1304, %v1312
        %v1315 = vmul.f32 %v1305, %v1312
        %v1316 = vmul.f32 %v1306, %v1312
        %v1317 = vadd.f32 %v1313, 0.0
        %v1318 = vadd.f32 %v1314, 0.0
        %v1319 = vadd.f32 %v1315, 0.0
        %v1320 = vadd.f32 %v1316, 0.0
        %v1321 = vlaneseq
        %v1322 = vshrl.u32 %v1321, 7
        %v1323 = vsub.s32 7, %v1322
        %v1324 = vrot.slane %v1300, %v1323
        %v1325 = vmul.f32 %v1304, %v1324
        %v1326 = vmul.f32 %v1305, %v1324
        %v1327 = vmul.f32 %v1306, %v1324
        %v1328 = vmul.f32 %v1307, %v1324
        %v1329 = vadd.f32 %v1325, 0.0
        %v1330 = vadd.f32 %v1326, 0.0
        %v1331 = vadd.f32 %v1327, 0.0
        %v1332 = vadd.f32 %v1328, 0.0
        %v1333 = vlaneseq
        %v1334 = vshrl.u32 %v1333, 7
        %v1335 = vsub.s32 7, %v1334
        %v1336 = vrot.slane %v1301, %v1335
        %v1337 = vmul.f32 %v1305, %v1336
        %v1338 = vmul.f32 %v1306, %v1336
        %v1339 = vmul.f32 %v1307, %v1336
        %v1340 = vmul.f32 %v1308, %v1336
        %v1341 = vadd.f32 %v1317, %v1337
        %v1342 = vadd.f32 %v1318, %v1338
        %v1343 = vadd.f32 %v1319, %v1339
        %v1344 = vadd.f32 %v1320, %v1340
        %v1345 = vld [vmem:[#allocation2 + $0x1] sm:$0xff]
        %v1346 = vld [vmem:[#allocation2 + $0x9] sm:$0xff]
        %v1347 = vld [vmem:[#allocation2 + $0x11] sm:$0xff]
        %v1348 = vld [vmem:[#allocation2 + $0x19] sm:$0xff]
        %v1349 = vld [vmem:[#allocation2 + $0x21] sm:$0xff]
        %v1350 = vld [vmem:[#allocation2 + $0x29] sm:$0xff]
        %v1351 = vld [vmem:[#allocation2 + $0x31] sm:$0xff]
        %v1352 = vlaneseq
        %v1353 = vshrl.u32 %v1352, 7
        %v1354 = vsub.s32 0, %v1353
        %v1355 = vrot.slane %v1299, %v1354
        %v1356 = vmul.f32 %v1345, %v1355
        %v1357 = vmul.f32 %v1346, %v1355
        %v1358 = vmul.f32 %v1347, %v1355
        %v1359 = vmul.f32 %v1348, %v1355
        %v1360 = vadd.f32 %v1329, %v1356
        %v1361 = vadd.f32 %v1330, %v1357
        %v1362 = vadd.f32 %v1331, %v1358
        %v1363 = vadd.f32 %v1332, %v1359
        %v1364 = vlaneseq
        %v1365 = vshrl.u32 %v1364, 7
        %v1366 = vsub.s32 0, %v1365
        %v1367 = vrot.slane %v1300, %v1366
        %v1368 = vmul.f32 %v1346, %v1367
        %v1369 = vmul.f32 %v1347, %v1367
        %v1370 = vmul.f32 %v1348, %v1367
        %v1371 = vmul.f32 %v1349, %v1367
        %v1372 = vadd.f32 %v1341, %v1368
        %v1373 = vadd.f32 %v1342, %v1369
        %v1374 = vadd.f32 %v1343, %v1370
        %v1375 = vadd.f32 %v1344, %v1371
        %v1376 = vlaneseq
        %v1377 = vshrl.u32 %v1376, 7
        %v1378 = vsub.s32 0, %v1377
        %v1379 = vrot.slane %v1301, %v1378
        %v1380 = vmul.f32 %v1347, %v1379
        %v1381 = vmul.f32 %v1348, %v1379
        %v1382 = vmul.f32 %v1349, %v1379
        %v1383 = vmul.f32 %v1350, %v1379
        %v1384 = vadd.f32 %v1360, %v1380
        %v1385 = vadd.f32 %v1361, %v1381
        %v1386 = vadd.f32 %v1362, %v1382
        %v1387 = vadd.f32 %v1363, %v1383
        %v1388 = vlaneseq
        %v1389 = vshrl.u32 %v1388, 7
        %v1390 = vsub.s32 0, %v1389
        %v1391 = vrot.slane %v1302, %v1390
        %v1392 = vmul.f32 %v1348, %v1391
        %v1393 = vmul.f32 %v1349, %v1391
        %v1394 = vmul.f32 %v1350, %v1391
        %v1395 = vmul.f32 %v1351, %v1391
        %v1396 = vadd.f32 %v1372, %v1392
        %v1397 = vadd.f32 %v1373, %v1393
        %v1398 = vadd.f32 %v1374, %v1394
        %v1399 = vadd.f32 %v1375, %v1395
        %v1400 = vld [vmem:[#allocation2 + $0x2] sm:$0xff]
        %v1401 = vld [vmem:[#allocation2 + $0xa] sm:$0xff]
        %v1402 = vld [vmem:[#allocation2 + $0x12] sm:$0xff]
        %v1403 = vld [vmem:[#allocation2 + $0x1a] sm:$0xff]
        %v1404 = vld [vmem:[#allocation2 + $0x22] sm:$0xff]
        %v1405 = vld [vmem:[#allocation2 + $0x2a] sm:$0xff]
        %v1406 = vld [vmem:[#allocation2 + $0x32] sm:$0xff]
        %v1407 = vlaneseq
        %v1408 = vshrl.u32 %v1407, 7
        %v1409 = vsub.s32 1, %v1408
        %v1410 = vrot.slane %v1299, %v1409
        %v1411 = vmul.f32 %v1400, %v1410
        %v1412 = vmul.f32 %v1401, %v1410
        %v1413 = vmul.f32 %v1402, %v1410
        %v1414 = vmul.f32 %v1403, %v1410
        %v1415 = vadd.f32 %v1384, %v1411
        %v1416 = vadd.f32 %v1385, %v1412
        %v1417 = vadd.f32 %v1386, %v1413
        %v1418 = vadd.f32 %v1387, %v1414
        %v1419 = vlaneseq
        %v1420 = vshrl.u32 %v1419, 7
        %v1421 = vsub.s32 1, %v1420
        %v1422 = vrot.slane %v1300, %v1421
        %v1423 = vmul.f32 %v1401, %v1422
        %v1424 = vmul.f32 %v1402, %v1422
        %v1425 = vmul.f32 %v1403, %v1422
        %v1426 = vmul.f32 %v1404, %v1422
        %v1427 = vadd.f32 %v1396, %v1423
        %v1428 = vadd.f32 %v1397, %v1424
        %v1429 = vadd.f32 %v1398, %v1425
        %v1430 = vadd.f32 %v1399, %v1426
        %v1431 = vlaneseq
        %v1432 = vshrl.u32 %v1431, 7
        %v1433 = vsub.s32 1, %v1432
        %v1434 = vrot.slane %v1301, %v1433
        %v1435 = vmul.f32 %v1402, %v1434
        %v1436 = vmul.f32 %v1403, %v1434
        %v1437 = vmul.f32 %v1404, %v1434
        %v1438 = vmul.f32 %v1405, %v1434
        %v1439 = vadd.f32 %v1415, %v1435
        %v1440 = vadd.f32 %v1416, %v1436
        %v1441 = vadd.f32 %v1417, %v1437
        %v1442 = vadd.f32 %v1418, %v1438
        %v1443 = vlaneseq
        %v1444 = vshrl.u32 %v1443, 7
        %v1445 = vsub.s32 1, %v1444
        %v1446 = vrot.slane %v1302, %v1445
        %v1447 = vmul.f32 %v1403, %v1446
        %v1448 = vmul.f32 %v1404, %v1446
        %v1449 = vmul.f32 %v1405, %v1446
        %v1450 = vmul.f32 %v1406, %v1446
        %v1451 = vadd.f32 %v1427, %v1447
        %v1452 = vadd.f32 %v1428, %v1448
        %v1453 = vadd.f32 %v1429, %v1449
        %v1454 = vadd.f32 %v1430, %v1450
        %v1455 = vld [vmem:[#allocation2 + $0x3] sm:$0xff]
        %v1456 = vld [vmem:[#allocation2 + $0xb] sm:$0xff]
        %v1457 = vld [vmem:[#allocation2 + $0x13] sm:$0xff]
        %v1458 = vld [vmem:[#allocation2 + $0x1b] sm:$0xff]
        %v1459 = vld [vmem:[#allocation2 + $0x23] sm:$0xff]
        %v1460 = vld [vmem:[#allocation2 + $0x2b] sm:$0xff]
        %v1461 = vld [vmem:[#allocation2 + $0x33] sm:$0xff]
        %v1462 = vlaneseq
        %v1463 = vshrl.u32 %v1462, 7
        %v1464 = vsub.s32 2, %v1463
        %v1465 = vrot.slane %v1299, %v1464
        %v1466 = vmul.f32 %v1455, %v1465
        %v1467 = vmul.f32 %v1456, %v1465
        %v1468 = vmul.f32 %v1457, %v1465
        %v1469 = vmul.f32 %v1458, %v1465
        %v1470 = vadd.f32 %v1439, %v1466
        %v1471 = vadd.f32 %v1440, %v1467
        %v1472 = vadd.f32 %v1441, %v1468
        %v1473 = vadd.f32 %v1442, %v1469
        %v1474 = vlaneseq
        %v1475 = vshrl.u32 %v1474, 7
        %v1476 = vsub.s32 2, %v1475
        %v1477 = vrot.slane %v1300, %v1476
        %v1478 = vmul.f32 %v1456, %v1477
        %v1479 = vmul.f32 %v1457, %v1477
        %v1480 = vmul.f32 %v1458, %v1477
        %v1481 = vmul.f32 %v1459, %v1477
        %v1482 = vadd.f32 %v1451, %v1478
        %v1483 = vadd.f32 %v1452, %v1479
        %v1484 = vadd.f32 %v1453, %v1480
        %v1485 = vadd.f32 %v1454, %v1481
        %v1486 = vlaneseq
        %v1487 = vshrl.u32 %v1486, 7
        %v1488 = vsub.s32 2, %v1487
        %v1489 = vrot.slane %v1301, %v1488
        %v1490 = vmul.f32 %v1457, %v1489
        %v1491 = vmul.f32 %v1458, %v1489
        %v1492 = vmul.f32 %v1459, %v1489
        %v1493 = vmul.f32 %v1460, %v1489
        %v1494 = vadd.f32 %v1470, %v1490
        %v1495 = vadd.f32 %v1471, %v1491
        %v1496 = vadd.f32 %v1472, %v1492
        %v1497 = vadd.f32 %v1473, %v1493
        %v1498 = vlaneseq
        %v1499 = vshrl.u32 %v1498, 7
        %v1500 = vsub.s32 2, %v1499
        %v1501 = vrot.slane %v1302, %v1500
        %v1502 = vmul.f32 %v1458, %v1501
        %v1503 = vmul.f32 %v1459, %v1501
        %v1504 = vmul.f32 %v1460, %v1501
        %v1505 = vmul.f32 %v1461, %v1501
        %v1506 = vadd.f32 %v1482, %v1502
        %v1507 = vadd.f32 %v1483, %v1503
        %v1508 = vadd.f32 %v1484, %v1504
        %v1509 = vadd.f32 %v1485, %v1505
        %v1510 = vld [vmem:[#allocation2 + $0x4] sm:$0xff]
        %v1511 = vld [vmem:[#allocation2 + $0xc] sm:$0xff]
        %v1512 = vld [vmem:[#allocation2 + $0x14] sm:$0xff]
        %v1513 = vld [vmem:[#allocation2 + $0x1c] sm:$0xff]
        %v1514 = vld [vmem:[#allocation2 + $0x24] sm:$0xff]
        %v1515 = vld [vmem:[#allocation2 + $0x2c] sm:$0xff]
        %v1516 = vld [vmem:[#allocation2 + $0x34] sm:$0xff]
        %v1517 = vlaneseq
        %v1518 = vshrl.u32 %v1517, 7
        %v1519 = vsub.s32 3, %v1518
        %v1520 = vrot.slane %v1299, %v1519
        %v1521 = vmul.f32 %v1510, %v1520
        %v1522 = vmul.f32 %v1511, %v1520
        %v1523 = vmul.f32 %v1512, %v1520
        %v1524 = vmul.f32 %v1513, %v1520
        %v1525 = vadd.f32 %v1494, %v1521
        %v1526 = vadd.f32 %v1495, %v1522
        %v1527 = vadd.f32 %v1496, %v1523
        %v1528 = vadd.f32 %v1497, %v1524
        %v1529 = vlaneseq
        %v1530 = vshrl.u32 %v1529, 7
        %v1531 = vsub.s32 3, %v1530
        %v1532 = vrot.slane %v1300, %v1531
        %v1533 = vmul.f32 %v1511, %v1532
        %v1534 = vmul.f32 %v1512, %v1532
        %v1535 = vmul.f32 %v1513, %v1532
        %v1536 = vmul.f32 %v1514, %v1532
        %v1537 = vadd.f32 %v1506, %v1533
        %v1538 = vadd.f32 %v1507, %v1534
        %v1539 = vadd.f32 %v1508, %v1535
        %v1540 = vadd.f32 %v1509, %v1536
        %v1541 = vlaneseq
        %v1542 = vshrl.u32 %v1541, 7
        %v1543 = vsub.s32 3, %v1542
        %v1544 = vrot.slane %v1301, %v1543
        %v1545 = vmul.f32 %v1512, %v1544
        %v1546 = vmul.f32 %v1513, %v1544
        %v1547 = vmul.f32 %v1514, %v1544
        %v1548 = vmul.f32 %v1515, %v1544
        %v1549 = vadd.f32 %v1525, %v1545
        %v1550 = vadd.f32 %v1526, %v1546
        %v1551 = vadd.f32 %v1527, %v1547
        %v1552 = vadd.f32 %v1528, %v1548
        %v1553 = vlaneseq
        %v1554 = vshrl.u32 %v1553, 7
        %v1555 = vsub.s32 3, %v1554
        %v1556 = vrot.slane %v1302, %v1555
        %v1557 = vmul.f32 %v1513, %v1556
        %v1558 = vmul.f32 %v1514, %v1556
        %v1559 = vmul.f32 %v1515, %v1556
        %v1560 = vmul.f32 %v1516, %v1556
        %v1561 = vadd.f32 %v1537, %v1557
        %v1562 = vadd.f32 %v1538, %v1558
        %v1563 = vadd.f32 %v1539, %v1559
        %v1564 = vadd.f32 %v1540, %v1560
        %v1565 = vld [vmem:[#allocation2 + $0x5] sm:$0xff]
        %v1566 = vld [vmem:[#allocation2 + $0xd] sm:$0xff]
        %v1567 = vld [vmem:[#allocation2 + $0x15] sm:$0xff]
        %v1568 = vld [vmem:[#allocation2 + $0x1d] sm:$0xff]
        %v1569 = vld [vmem:[#allocation2 + $0x25] sm:$0xff]
        %v1570 = vld [vmem:[#allocation2 + $0x2d] sm:$0xff]
        %v1571 = vld [vmem:[#allocation2 + $0x35] sm:$0xff]
        %v1572 = vlaneseq
        %v1573 = vshrl.u32 %v1572, 7
        %v1574 = vsub.s32 4, %v1573
        %v1575 = vrot.slane %v1299, %v1574
        %v1576 = vmul.f32 %v1565, %v1575
        %v1577 = vmul.f32 %v1566, %v1575
        %v1578 = vmul.f32 %v1567, %v1575
        %v1579 = vmul.f32 %v1568, %v1575
        %v1580 = vadd.f32 %v1549, %v1576
        %v1581 = vadd.f32 %v1550, %v1577
        %v1582 = vadd.f32 %v1551, %v1578
        %v1583 = vadd.f32 %v1552, %v1579
        %v1584 = vlaneseq
        %v1585 = vshrl.u32 %v1584, 7
        %v1586 = vsub.s32 4, %v1585
        %v1587 = vrot.slane %v1300, %v1586
        %v1588 = vmul.f32 %v1566, %v1587
        %v1589 = vmul.f32 %v1567, %v1587
        %v1590 = vmul.f32 %v1568, %v1587
        %v1591 = vmul.f32 %v1569, %v1587
        %v1592 = vadd.f32 %v1561, %v1588
        %v1593 = vadd.f32 %v1562, %v1589
        %v1594 = vadd.f32 %v1563, %v1590
        %v1595 = vadd.f32 %v1564, %v1591
        %v1596 = vlaneseq
        %v1597 = vshrl.u32 %v1596, 7
        %v1598 = vsub.s32 4, %v1597
        %v1599 = vrot.slane %v1301, %v1598
        %v1600 = vmul.f32 %v1567, %v1599
        %v1601 = vmul.f32 %v1568, %v1599
        %v1602 = vmul.f32 %v1569, %v1599
        %v1603 = vmul.f32 %v1570, %v1599
        %v1604 = vadd.f32 %v1580, %v1600
        %v1605 = vadd.f32 %v1581, %v1601
        %v1606 = vadd.f32 %v1582, %v1602
        %v1607 = vadd.f32 %v1583, %v1603
        %v1608 = vlaneseq
        %v1609 = vshrl.u32 %v1608, 7
        %v1610 = vsub.s32 4, %v1609
        %v1611 = vrot.slane %v1302, %v1610
        %v1612 = vmul.f32 %v1568, %v1611
        %v1613 = vmul.f32 %v1569, %v1611
        %v1614 = vmul.f32 %v1570, %v1611
        %v1615 = vmul.f32 %v1571, %v1611
        %v1616 = vadd.f32 %v1592, %v1612
        %v1617 = vadd.f32 %v1593, %v1613
        %v1618 = vadd.f32 %v1594, %v1614
        %v1619 = vadd.f32 %v1595, %v1615
        %v1620 = vld [vmem:[#allocation2 + $0x6] sm:$0xff]
        %v1621 = vld [vmem:[#allocation2 + $0xe] sm:$0xff]
        %v1622 = vld [vmem:[#allocation2 + $0x16] sm:$0xff]
        %v1623 = vld [vmem:[#allocation2 + $0x1e] sm:$0xff]
        %v1624 = vld [vmem:[#allocation2 + $0x26] sm:$0xff]
        %v1625 = vld [vmem:[#allocation2 + $0x2e] sm:$0xff]
        %v1626 = vld [vmem:[#allocation2 + $0x36] sm:$0xff]
        %v1627 = vlaneseq
        %v1628 = vshrl.u32 %v1627, 7
        %v1629 = vsub.s32 5, %v1628
        %v1630 = vrot.slane %v1299, %v1629
        %v1631 = vmul.f32 %v1620, %v1630
        %v1632 = vmul.f32 %v1621, %v1630
        %v1633 = vmul.f32 %v1622, %v1630
        %v1634 = vmul.f32 %v1623, %v1630
        %v1635 = vadd.f32 %v1604, %v1631
        %v1636 = vadd.f32 %v1605, %v1632
        %v1637 = vadd.f32 %v1606, %v1633
        %v1638 = vadd.f32 %v1607, %v1634
        %v1639 = vlaneseq
        %v1640 = vshrl.u32 %v1639, 7
        %v1641 = vsub.s32 5, %v1640
        %v1642 = vrot.slane %v1300, %v1641
        %v1643 = vmul.f32 %v1621, %v1642
        %v1644 = vmul.f32 %v1622, %v1642
        %v1645 = vmul.f32 %v1623, %v1642
        %v1646 = vmul.f32 %v1624, %v1642
        %v1647 = vadd.f32 %v1616, %v1643
        %v1648 = vadd.f32 %v1617, %v1644
        %v1649 = vadd.f32 %v1618, %v1645
        %v1650 = vadd.f32 %v1619, %v1646
        %v1651 = vlaneseq
        %v1652 = vshrl.u32 %v1651, 7
        %v1653 = vsub.s32 5, %v1652
        %v1654 = vrot.slane %v1301, %v1653
        %v1655 = vmul.f32 %v1622, %v1654
        %v1656 = vmul.f32 %v1623, %v1654
        %v1657 = vmul.f32 %v1624, %v1654
        %v1658 = vmul.f32 %v1625, %v1654
        %v1659 = vadd.f32 %v1635, %v1655
        %v1660 = vadd.f32 %v1636, %v1656
        %v1661 = vadd.f32 %v1637, %v1657
        %v1662 = vadd.f32 %v1638, %v1658
        %v1663 = vlaneseq
        %v1664 = vshrl.u32 %v1663, 7
        %v1665 = vsub.s32 5, %v1664
        %v1666 = vrot.slane %v1302, %v1665
        %v1667 = vmul.f32 %v1623, %v1666
        %v1668 = vmul.f32 %v1624, %v1666
        %v1669 = vmul.f32 %v1625, %v1666
        %v1670 = vmul.f32 %v1626, %v1666
        %v1671 = vadd.f32 %v1647, %v1667
        %v1672 = vadd.f32 %v1648, %v1668
        %v1673 = vadd.f32 %v1649, %v1669
        %v1674 = vadd.f32 %v1650, %v1670
        %v1675 = vld [vmem:[#allocation2 + $0x7] sm:$0xff]
        %v1676 = vld [vmem:[#allocation2 + $0xf] sm:$0xff]
        %v1677 = vld [vmem:[#allocation2 + $0x17] sm:$0xff]
        %v1678 = vld [vmem:[#allocation2 + $0x1f] sm:$0xff]
        %v1679 = vld [vmem:[#allocation2 + $0x27] sm:$0xff]
        %v1680 = vld [vmem:[#allocation2 + $0x2f] sm:$0xff]
        %v1681 = vld [vmem:[#allocation2 + $0x37] sm:$0xff]
        %v1682 = vlaneseq
        %v1683 = vshrl.u32 %v1682, 7
        %v1684 = vsub.s32 6, %v1683
        %v1685 = vrot.slane %v1299, %v1684
        %v1686 = vmul.f32 %v1675, %v1685
        %v1687 = vmul.f32 %v1676, %v1685
        %v1688 = vmul.f32 %v1677, %v1685
        %v1689 = vmul.f32 %v1678, %v1685
        %v1690 = vadd.f32 %v1659, %v1686
        %v1691 = vadd.f32 %v1660, %v1687
        %v1692 = vadd.f32 %v1661, %v1688
        %v1693 = vadd.f32 %v1662, %v1689
        %v1694 = vlaneseq
        %v1695 = vshrl.u32 %v1694, 7
        %v1696 = vsub.s32 6, %v1695
        %v1697 = vrot.slane %v1300, %v1696
        %v1698 = vmul.f32 %v1676, %v1697
        %v1699 = vmul.f32 %v1677, %v1697
        %v1700 = vmul.f32 %v1678, %v1697
        %v1701 = vmul.f32 %v1679, %v1697
        %v1702 = vadd.f32 %v1671, %v1698
        %v1703 = vadd.f32 %v1672, %v1699
        %v1704 = vadd.f32 %v1673, %v1700
        %v1705 = vadd.f32 %v1674, %v1701
        %v1706 = vlaneseq
        %v1707 = vshrl.u32 %v1706, 7
        %v1708 = vsub.s32 6, %v1707
        %v1709 = vrot.slane %v1301, %v1708
        %v1710 = vmul.f32 %v1677, %v1709
        %v1711 = vmul.f32 %v1678, %v1709
        %v1712 = vmul.f32 %v1679, %v1709
        %v1713 = vmul.f32 %v1680, %v1709
        %v1714 = vadd.f32 %v1690, %v1710
        %v1715 = vadd.f32 %v1691, %v1711
        %v1716 = vadd.f32 %v1692, %v1712
        %v1717 = vadd.f32 %v1693, %v1713
        %v1718 = vlaneseq
        %v1719 = vshrl.u32 %v1718, 7
        %v1720 = vsub.s32 6, %v1719
        %v1721 = vrot.slane %v1302, %v1720
        %v1722 = vmul.f32 %v1678, %v1721
        %v1723 = vmul.f32 %v1679, %v1721
        %v1724 = vmul.f32 %v1680, %v1721
        %v1725 = vmul.f32 %v1681, %v1721
        %v1726 = vadd.f32 %v1702, %v1722
        %v1727 = vadd.f32 %v1703, %v1723
        %v1728 = vadd.f32 %v1704, %v1724
        %v1729 = vadd.f32 %v1705, %v1725
        %v1730 = vadd.f32 %v1726, %v1714
        %v1731 = vadd.f32 %v1727, %v1715
        %v1732 = vadd.f32 %v1728, %v1716
        %v1733 = vadd.f32 %v1729, %v1717
        %v1734 = vld [vmem:[%s10] sm:$0x1]
        %v1736 = vlaneseq
        %v1737 = vshrl.u32 %v1736, 7
        %v1738 = vsub.s32 0, %v1737
        %v1739 = vrot.slane %v1734, %v1738
        %v1741 = vadd.f32 %v1730, %v1739
        %v1742 = vadd.f32 %v1731, %v1739
        %v1743 = vadd.f32 %v1732, %v1739
        %v1744 = vadd.f32 %v1733, %v1739
        %v1745 = vxor.u32 %v1741, 2147483648
        %v1746 = vxor.u32 %v1742, 2147483648
        %v1747 = vxor.u32 %v1743, 2147483648
        %v1748 = vxor.u32 %v1744, 2147483648
        %v1749 = vmul.f32 %v1745, 1.442695
        %v1750 = vpow.pop %v1749
        %v1751 = vmul.f32 %v1746, 1.442695
        %v1752 = vpow.pop %v1751
        %v1753 = vmul.f32 %v1747, 1.442695
        %v1754 = vpow.pop %v1753
        %v1755 = vmul.f32 %v1748, 1.442695
        %v1756 = vpow.pop %v1755
        %v1757 = vadd.f32 %v1750, 1.0
        %v1758 = vadd.f32 %v1752, 1.0
        %v1759 = vadd.f32 %v1754, 1.0
        %v1760 = vadd.f32 %v1756, 1.0
        %v1761 = vrcp.pop %v1757
        %v1762 = vmul.f32 1.0, %v1761
        %v1763 = vrcp.pop %v1758
        %v1764 = vmul.f32 1.0, %v1763
        %v1765 = vrcp.pop %v1759
        %v1766 = vmul.f32 1.0, %v1765
        %v1767 = vrcp.pop %v1760
        %v1768 = vmul.f32 1.0, %v1767
        %v1769 = vmul.f32 %v1741, %v1762
        %v1770 = vmul.f32 %v1742, %v1764
        %v1771 = vmul.f32 %v1743, %v1766
        %v1772 = vmul.f32 %v1744, %v1768
        %v1773 = vpack.c.bf16 %v1770, %v1769
        %v1774 = vpack.c.bf16 %v1772, %v1771
        %v1775 = vld [vmem:[#allocation14] sm:$0xf]
        %v1776 = vld [vmem:[#allocation14 + $0x4] sm:$0xf]
        %v1777 = vld [vmem:[#allocation14 + $0x8] sm:$0xf]
        %v1778 = vld [vmem:[#allocation14 + $0xc] sm:$0xf]
        %v1779 = vld [vmem:[#allocation14 + $0x10] sm:$0xf]
        %v1780 = vld [vmem:[#allocation14 + $0x14] sm:$0xf]
        %v1781 = vld [vmem:[#allocation14 + $0x18] sm:$0xf]
        %v1782 = vld [vmem:[#allocation14 + $0x1c] sm:$0xf]
        %v1783 = vld [vmem:[#allocation14 + $0x20] sm:$0xf]
        %v1784 = vld [vmem:[#allocation14 + $0x24] sm:$0xf]
        %v1785 = vld [vmem:[#allocation14 + $0x28] sm:$0xf]
        %v1786 = vld [vmem:[#allocation14 + $0x2c] sm:$0xf]
        %v1787 = vld [vmem:[#allocation14 + $0x30] sm:$0xf]
        %v1788 = vld [vmem:[#allocation14 + $0x34] sm:$0xf]
        %v1789 = vld [vmem:[#allocation14 + $0x38] sm:$0xf]
        %v1790 = vld [vmem:[#allocation14 + $0x3c] sm:$0xf]
        %v1791 = vld [vmem:[%s12] sm:$0x1]
        %v1793 = vlaneseq
        %v1794 = vshrl.u32 %v1793, 7
        %v1795 = vsub.s32 0, %v1794
        %v1796 = vrot.slane %v1791, %v1795
        %v1814 = vunpack.c.l.b16 %v1775
        %v1815 = vunpack.c.l.b16 %v1776
        %v1816 = vunpack.c.l.b16 %v1777
        %v1817 = vunpack.c.l.b16 %v1778
        %v1818 = vunpack.c.l.b16 %v1779
        %v1819 = vunpack.c.l.b16 %v1780
        %v1820 = vunpack.c.l.b16 %v1781
        %v1821 = vunpack.c.l.b16 %v1782
        %v1822 = vunpack.c.l.b16 %v1783
        %v1823 = vunpack.c.l.b16 %v1784
        %v1824 = vunpack.c.l.b16 %v1785
        %v1825 = vunpack.c.l.b16 %v1786
        %v1826 = vunpack.c.l.b16 %v1787
        %v1827 = vunpack.c.l.b16 %v1788
        %v1828 = vunpack.c.l.b16 %v1789
        %v1829 = vunpack.c.l.b16 %v1790
        %v1830 = vpack.c.b16 %v1815, %v1814
        %v1831 = vpack.c.b16 %v1817, %v1816
        %v1832 = vpack.c.b16 %v1819, %v1818
        %v1833 = vpack.c.b16 %v1821, %v1820
        %v1834 = vpack.c.b16 %v1823, %v1822
        %v1835 = vpack.c.b16 %v1825, %v1824
        %v1836 = vpack.c.b16 %v1827, %v1826
        %v1837 = vpack.c.b16 %v1829, %v1828
        %1846 = vmatprep.subr.bf16.mxu0 0
        %1847 = vmatpush1.bf16.msra.mxu0 %v1837
        %1848 = vmatprep.subr.bf16.mxu0 0
        %1849 = vmatpush1.bf16.msra.mxu0 %v1836
        %1850 = vmatprep.subr.bf16.mxu0 0
        %1851 = vmatpush1.bf16.msra.mxu0 %v1835
        %1852 = vmatprep.subr.bf16.mxu0 0
        %1853 = vmatpush1.bf16.msra.mxu0 %v1834
        %1854 = vmatprep.subr.bf16.mxu0 0
        %1855 = vmatpush1.bf16.msra.mxu0 %v1833
        %1856 = vmatprep.subr.bf16.mxu0 0
        %1857 = vmatpush1.bf16.msra.mxu0 %v1832
        %1858 = vmatprep.subr.bf16.mxu0 0
        %1859 = vmatpush1.bf16.msra.mxu0 %v1831
        %1860 = vmatprep.subr.bf16.mxu0 0
        %1861 = vmatpush1.bf16.msra.mxu0 %v1830
        %1862 = vmatprep.subr.bf16.mxu0 0
        %1863 = vmatpush2.bf16.msra.mxu0 0
        %1864 = vmatprep.subr.bf16.mxu0 0
        %1865 = vmatpush2.bf16.msra.mxu0 0
        %1866 = vmatprep.subr.bf16.mxu0 0
        %1867 = vmatpush2.bf16.msra.mxu0 0
        %1868 = vmatprep.subr.bf16.mxu0 0
        %1869 = vmatpush2.bf16.msra.mxu0 0
        %1870 = vmatprep.subr.bf16.mxu0 0
        %1871 = vmatpush2.bf16.msra.mxu0 0
        %1872 = vmatprep.subr.bf16.mxu0 0
        %1873 = vmatpush2.bf16.msra.mxu0 0
        %1874 = vmatprep.subr.bf16.mxu0 0
        %1875 = vmatpush2.bf16.msra.mxu0 0
        %1876 = vmatprep.subr.bf16.mxu0 0
        %1877 = vmatpush2.bf16.msra.mxu0 0
        %1878 = vmatprep.mubr.bf16.mxu0 0
        %1879 = vmatmul.mubr.bf16.gmra.mxu0 %v1773
        %v1880 = vpop.f32.mrf.mxu0
        %v1881 = vadd.f32 %v1796, %v1880
        %v1882 = vpop.f32.mrf.mxu0
        %v1883 = vpop.f32.mrf.mxu0
        %v1884 = vadd.f32 %v1796, %v1883
        %v1885 = vpop.f32.mrf.mxu0
        %1886 = vmatprep.mubr.bf16.mxu0 0
        %1887 = vmatmul.mubr.bf16.gmra.mxu0 %v1774
        %v1888 = vpop.f32.mrf.mxu0
        %v1889 = vadd.f32 %v1796, %v1888
        %v1890 = vpop.f32.mrf.mxu0
        %v1891 = vpop.f32.mrf.mxu0
        %v1892 = vadd.f32 %v1796, %v1891
        %v1893 = vpop.f32.mrf.mxu0
        %1894 = vdwg.mxu0
        %1895 = vst [vmem:[%s643] sm:$0xff] %v1881
        %1896 = vst [vmem:[%s643 + $0x8] sm:$0xff] %v1884
        %1897 = vst [vmem:[%s643 + $0x10] sm:$0xff] %v1889
        %1898 = vst [vmem:[%s643 + $0x18] sm:$0xff] %v1892
        %s1899 = sand.u32 %s367, 1
        %s1900 = scalar_lea.sflag [#allocation5], %s1899
        %s1901 = sand.u32 %s367, 1
        %s1902 = smul.addr %s1901, 32
        %s1903 = scalar_lea.vmem [#allocation15], %s1902
        // Predicated region
        $region101: #{tpu_custom_call.1} parent=71 // pred_check
          %p1904 = pneg %p377
        $region102: #{tpu_custom_call.1} parent=71 // pred_check_branch
          %1906 = sbr.rel (%p1904) target = $region104
        $region103: #{tpu_custom_call.1} parent=71 // pred_region
          %s1907 = smul.u32 4, %s40
          %s1909 = ssub.s32 512, 512
          %1910 = vsyncadd %s1900, %s1909
          %s1911 = smul.addr %s39, 8
          %s1912 = sadd.s32 %s1907, %s1911
          %s1913 = smul.addr %s1912, 128
          %s1914 = scalar_lea.hbm %s13, %s1913
          %s1915 = sshll.u32 %s1903, 4
          %s1916 = int_to_ptr.vmem [resolvable:$true] %s1915
          %1921 = dma.vmem_to_hbm [thread:$0]  %s1916, 512, %s1914, %s1900, 128, 128, 8
        $region104: #{tpu_custom_call.1} parent=71 // pred_fallthru
          _
      $region72: #{tpu_custom_call.1} parent=5 // pred_fallthru
        _
      %p1922 = scmp.le.s32.totalorder 2, %s30
      // Predicated region
      $region105: #{tpu_custom_call.1} parent=5 // pred_check
        %p1923 = pneg %p1922
      $region106: #{tpu_custom_call.1} parent=5 // pred_check_branch
        %1925 = sbr.rel (%p1923) target = $region108
      $region107: #{tpu_custom_call.1} parent=5 // pred_region
        %s1926 = ssub.s32 %s30, 2
        // Predicated region
        $region109: #{tpu_custom_call.1} parent=107 // pred_check
          %p1927 = pneg %p383
        $region110: #{tpu_custom_call.1} parent=107 // pred_check_branch
          %1929 = sbr.rel (%p1927) target = $region112
        $region111: #{tpu_custom_call.1} parent=107 // pred_region
          %s1930 = sand.u32 %s368, 1
          %s1931 = scalar_lea.sflag [#allocation5], %s1930
          %s1932 = sand.u32 %s368, 1
          %s1933 = smul.addr %s1932, 32
          %s1934 = scalar_lea.vmem [#allocation15], %s1933
          %1935 = dma.done %s1931, 512
        $region112: #{tpu_custom_call.1} parent=107 // pred_fallthru
          _
      $region108: #{tpu_custom_call.1} parent=5 // pred_fallthru
        _
    $region6: #{tpu_custom_call.1} parent=1 // loop_footer
      %s34 = sadd.s32 1, %s30
    $region7: #{tpu_custom_call.1} parent=1 // loop_footer_branch
      %29 = sbr.rel target = $region3
    $region8: #{tpu_custom_call.1} parent=1 // loop_exit
      _
    %1936 = vsyncpa [#allocation4], 1
    %s1937 = scalar_lea.sflag [#allocation4], 1
    %1938 = vsyncpa %s1937, 1
    %1939 = vsyncpa [#allocation7], 1
    %s1940 = scalar_lea.sflag [#allocation7], 1
    %1941 = vsyncpa %s1940, 1
    %1942 = vsyncpa [#allocation10], 1
    %1943 = vsyncpa [#allocation13], 1
    %1944 = vsyncpa [#allocation5], 1
    %s1945 = scalar_lea.sflag [#allocation5], 1
    %1946 = vsyncpa %s1945, 1

</llo_original>
